<compile_context>
chip_gen: v5e
topology: v5e:2x2
jax: 0.10.0
libtpu: 0.0.40
codegen_flags: <defaults>
</compile_context>

<pallas_src>
import functools

import jax
import jax.numpy as jnp
from jax.experimental import pallas as pl
from jax.experimental.pallas import tpu as pltpu

SELU_ALPHA = 1.6732632423543772
SELU_SCALE = 1.0507009873554805


def _selu(x):
    # selu(x) = scale*x                 , x > 0
    #         = scale*alpha*(exp(x)-1)  , x <= 0
    # exp(min(x, 0)) keeps the dead branch finite (no inf, EUP-cost-neutral).
    sa = SELU_SCALE * SELU_ALPHA
    neg = sa * jnp.exp(jnp.minimum(x, 0)) - sa
    return jnp.where(x > 0, SELU_SCALE * x, neg)


def _round_up(v, m):
    return ((v + m - 1) // m) * m


def _cdiv(a, b):
    return -(-a // b)


# -----------------------------------------------------------------------------
# Fused kernel: f MLP (3->8->1 per user), h MLP (2->16->2), g head (U+2->G->1).
# Layout inside the kernel: batch in LANES, users / hidden units in SUBLANES.
#   x_ref   : (3, U, TN)  per-channel user features (distance, credit, cap)
#   t_ref   : (2, TN)     task (x, y)
#   wc_ref  : (16, 12)    column-packed f/h weights (compute dtype):
#               0..2: f1_w[c,:] (8)   3: f1_b (8)   4: f2_w[:,0] (8)  5: f2_b (1)
#               6,7 : h1_w[c,:] (16)  8: h1_b (16)  9,10: h2_w[:,k]   11: h2_b (2)
#   wg_ref  : (G, 5)      column-packed g weights (f32):
#               0,1: g1_w[U+c,:]  2: g1_b  3: g2_w[:,0]  4: g2_b (element [0,0])
#   gwf_ref : (U, G)      g1 weight block acting on the f columns (f32, pinned)
#   f_ref   : (U, TN)     f output (transposed, f32)
#   g_ref   : (1, TN)     g output (transposed, lane-dense, f32)
# -----------------------------------------------------------------------------
def _fg_fused_kernel(x_ref, t_ref, wc_ref, wg_ref, gwf_ref, f_ref, g_ref,
                     *, U, G, cdt):
    def wf(r, c):
        return wc_ref[r:r + 1, c:c + 1]            # (1, 1) compute-dtype "scalar"

    x0 = x_ref[0].astype(cdt)                      # (U, TN)
    x1 = x_ref[1].astype(cdt)
    x2 = x_ref[2].astype(cdt)

    # ---- f MLP: 3 -> 8 -> 1 per user, unrolled VPU broadcast-FMAs ----------
    f_acc = None
    for j in range(8):
        pre = x0 * wf(j, 0) + x1 * wf(j, 1) + x2 * wf(j, 2) + wf(j, 3)
        term = _selu(pre) * wf(j, 4)               # dropout `do` -> identity (eval)
        f_acc = term if f_acc is None else f_acc + term
    f_plane = _selu(f_acc + wf(0, 5))              # (U, TN) compute dtype
    f32_plane = f_plane.astype(jnp.float32)
    f_ref[...] = f32_plane

    # ---- h MLP: 2 -> 16 -> 2, sublane-dense (16, TN) hidden plane ----------
    t0 = t_ref[0:1, :].astype(cdt)                 # (1, TN)
    t1 = t_ref[1:2, :].astype(cdt)
    h1w0 = wc_ref[0:16, 6:7]                       # (16, 1)
    h1w1 = wc_ref[0:16, 7:8]
    h1b = wc_ref[0:16, 8:9]
    h_hid = _selu(t0 * h1w0 + t1 * h1w1 + h1b)     # (16, TN); do2 -> identity
    h2w0 = wc_ref[0:16, 9:10]
    h2w1 = wc_ref[0:16, 10:11]
    h_out0 = _selu(jnp.sum(h_hid * h2w0, axis=0, keepdims=True)
                   .astype(jnp.float32) + wf(0, 11))            # (1, TN) f32
    h_out1 = _selu(jnp.sum(h_hid * h2w1, axis=0, keepdims=True)
                   .astype(jnp.float32) + wf(1, 11))            # (1, TN) f32

    # ---- g head: cat([f, h], 1) @ g1 -> SELU -> @ g2 (f32, (G, TN) plane) --
    # torch.cat([f, h], 1) @ g1_w == f @ g1_w[:U] + h @ g1_w[U:]
    # dropout `do3` -> identity (eval)
    rows = [jnp.sum(f32_plane * gwf_ref[:, j:j + 1], axis=0, keepdims=True)
            for j in range(G)]
    gf = jnp.concatenate(rows, axis=0) if G > 1 else rows[0]    # (G, TN) f32
    g1wh0 = wg_ref[:, 0:1]                                      # (G, 1) f32
    g1wh1 = wg_ref[:, 1:2]
    g1b = wg_ref[:, 2:3]
    g2w = wg_ref[:, 3:4]
    g_hid = _selu(gf + h_out0 * g1wh0 + h_out1 * g1wh1 + g1b)   # (G, TN)
    g_ref[...] = (jnp.sum(g_hid * g2w, axis=0, keepdims=True)
                  + wg_ref[0:1, 4:5])                           # (1, TN)


def _pack_columns(cols, rows, dtype):
    """Stack 1-D vectors as zero-padded columns of an (rows, len(cols)) array."""
    out = []
    for v in cols:
        v = jnp.asarray(v, dtype).reshape(-1)
        out.append(jnp.pad(v, (0, rows - v.shape[0]))[:, None])
    return jnp.concatenate(out, axis=1)


def fg_forward_t(x_t, task_t, params, *, tile_n=8192, compute_dtype=jnp.float32):
    """Channels-first fused forward.

    x_t: (3, U, N), task_t: (2, N)  ->  (f_t (U, N) f32, g (N,) f32).
    Using this entry point (and consuming f as (U, N)) avoids the wrapper-side
    transpose passes of `fg_forward` (a full extra HBM read+write per tensor).
    """
    C, U, N = x_t.shape
    assert C == 3 and task_t.shape == (2, N)
    G = params["g1_w"].shape[1]
    assert params["g1_w"].shape[0] == U + 2 and G >= 1
    assert tile_n % 128 == 0

    # Tile size: as large as possible, but (a) keep >= 2 grid steps whenever
    # N > 128 so the "parallel" axis can be split across v7x's 2 TensorCores,
    # and (b) keep the double-buffered per-step footprint well inside VMEM.
    n_ceil = _round_up(max(N, 1), 128)
    two_step = max(128, _round_up(_cdiv(n_ceil, 2), 128))
    vmem_cap = max(128, (24 * 1024 * 1024 // (8 * (4 * U + 3))) // 128 * 128)
    tn = min(tile_n, two_step, vmem_cap)
    n_pad = _round_up(n_ceil, tn)
    grid = (n_pad // tn,)

    if n_pad != N:  # zero-pad the batch (lane) axis only when needed
        x_t = jnp.pad(x_t, ((0, 0), (0, 0), (0, n_pad - N)))
        task_t = jnp.pad(task_t, ((0, 0), (0, n_pad - N)))

    cdt = compute_dtype
    p = params
    wc = _pack_columns(
        [p["f1_w"][0, :], p["f1_w"][1, :], p["f1_w"][2, :], p["f1_b"],
         p["f2_w"][:, 0], p["f2_b"],
         p["h1_w"][0, :], p["h1_w"][1, :], p["h1_b"],
         p["h2_w"][:, 0], p["h2_w"][:, 1], p["h2_b"]],
        rows=16, dtype=cdt)                                     # (16, 12)
    wg = _pack_columns(
        [p["g1_w"][U, :], p["g1_w"][U + 1, :], p["g1_b"],
         p["g2_w"][:, 0], p["g2_b"]],
        rows=G, dtype=jnp.float32)                              # (G, 5)
    gwf = jnp.asarray(p["g1_w"][:U, :], jnp.float32)            # (U, G)

    kernel = functools.partial(_fg_fused_kernel, U=U, G=G, cdt=cdt)

    flops = int(N * (U * (2 * 3 * 8 + 2 * 8)
                     + (2 * 2 * 16 + 2 * 16 * 2)
                     + (2 * (U + 2) * G + 2 * G)))
    transcendentals = int(N * (U * 9 + 18 + G))
    bytes_accessed = int(4 * n_pad * (3 * U + 2 + U + 1)
                         + 4 * (U * G + G * 5) + 4 * 16 * 12)

    f_t, g_t = pl.pallas_call(
        kernel,
        out_shape=(jax.ShapeDtypeStruct((U, n_pad), jnp.float32),
                   jax.ShapeDtypeStruct((1, n_pad), jnp.float32)),
        grid=grid,
        in_specs=[
            pl.BlockSpec((3, U, tn), lambda i: (0, 0, i)),
            pl.BlockSpec((2, tn), lambda i: (0, i)),
            pl.BlockSpec((16, 12), lambda i: (0, 0)),    # pinned, DMA'd once
            pl.BlockSpec((G, 5), lambda i: (0, 0)),      # pinned, DMA'd once
            pl.BlockSpec((U, G), lambda i: (0, 0)),      # pinned, DMA'd once
        ],
        out_specs=(
            pl.BlockSpec((U, tn), lambda i: (0, i)),
            pl.BlockSpec((1, tn), lambda i: (0, i)),     # lane-dense g out
        ),
        compiler_params=pltpu.CompilerParams(
            dimension_semantics=("parallel",),           # shard across v7x's 2 TCs
            vmem_limit_bytes=32 * 1024 * 1024),
        cost_estimate=pl.CostEstimate(
            flops=flops, transcendentals=transcendentals,
            bytes_accessed=bytes_accessed),
    )(x_t, task_t, wc, wg, gwf)

    if n_pad != N:
        return f_t[:, :N], g_t[0, :N]
    return f_t, g_t[0]


def fg_forward(x, task, params, *, tile_n=8192, compute_dtype=jnp.float32):
    """PyTorch-compatible interface: x (N, U, 3), task (N, 2) -> ((N, U), (N,)).

    The (N,U,3)->(3,U,N) / (U,N)->(N,U) transposes are wrapper-side layout
    plumbing only; call `fg_forward_t` directly to avoid them when the
    producer/consumer can work with the channels-first layout.
    """
    N, U, C = x.shape
    assert C == 3 and task.shape == (N, 2)
    f_t, g = fg_forward_t(jnp.transpose(x, (2, 1, 0)), task.T, params,
                          tile_n=tile_n, compute_dtype=compute_dtype)
    return f_t.T, g


# -----------------------------------------------------------------------------
# Pure-JAX reference (matches FGModel.forward in eval mode) and init.
# -----------------------------------------------------------------------------
def fg_reference(x, task, params):
    N, U, _ = x.shape
    xi = x.reshape(N * U, 3)
    a1 = _selu(xi @ params["f1_w"] + params["f1_b"])
    f = _selu(a1 @ params["f2_w"] + params["f2_b"])
    f_r = f.reshape(N, U)
    h1 = _selu(task @ params["h1_w"] + params["h1_b"])
    h = _selu(h1 @ params["h2_w"] + params["h2_b"])
    cat = jnp.concatenate([f_r, h], axis=1)
    g1 = _selu(cat @ params["g1_w"] + params["g1_b"])
    g = g1 @ params["g2_w"] + params["g2_b"]
    return f_r, g.reshape(N)


def init_params(key, user_num):
    """Matches FGModel.init_weights(): weights ~ U(-0.1, 0.1), biases = 0.
    Weights stored as (in, out) == torch weight.T."""
    g_temp = int(user_num * 0.15)
    assert g_temp >= 1
    ks = jax.random.split(key, 6)

    def u(k, shape):
        return jax.random.uniform(k, shape, jnp.float32, -0.1, 0.1)

    return dict(
        f1_w=u(ks[0], (3, 8)), f1_b=jnp.zeros((8,), jnp.float32),
        f2_w=u(ks[1], (8, 1)), f2_b=jnp.zeros((1,), jnp.float32),
        h1_w=u(ks[2], (2, 16)), h1_b=jnp.zeros((16,), jnp.float32),
        h2_w=u(ks[3], (16, 2)), h2_b=jnp.zeros((2,), jnp.float32),
        g1_w=u(ks[4], (user_num + 2, g_temp)),
        g1_b=jnp.zeros((g_temp,), jnp.float32),
        g2_w=u(ks[5], (g_temp, 1)), g2_b=jnp.zeros((1,), jnp.float32),
    )


if __name__ == "__main__":
    USER_NUM = 20                 # g_temp_size = int(20 * 0.15) = 3
    key = jax.random.PRNGKey(0)
    kx1, kt1, kx2, kt2, kp = jax.random.split(key, 5)
    params = init_params(kp, USER_NUM)

    # Test 1: tiny batch (single grid step), f32.
    N1 = 4
    x1 = jax.random.normal(kx1, (N1, USER_NUM, 3), jnp.float32)
    task1 = jax.random.normal(kt1, (N1, 2), jnp.float32)
    fwd1 = jax.jit(functools.partial(fg_forward, params=params))
    f1, g1 = fwd1(x1, task1)
    jax.block_until_ready((f1, g1))
    f1_ref, g1_ref = fg_reference(x1, task1, params)
    assert f1.shape == (N1, USER_NUM) and g1.shape == (N1,)
    assert f1.dtype == jnp.float32 and g1.dtype == jnp.float32
    assert jnp.allclose(f1, f1_ref, rtol=1e-3, atol=1e-4)
    assert jnp.allclose(g1, g1_ref, rtol=1e-3, atol=1e-4)

    # Test 2: batch exercising padding + a multi-step ("parallel") grid, f32.
    N2 = 300
    x2 = jax.random.normal(kx2, (N2, USER_NUM, 3), jnp.float32)
    task2 = jax.random.normal(kt2, (N2, 2), jnp.float32)
    fwd2 = jax.jit(functools.partial(fg_forward, params=params, tile_n=128))
    f2, g2 = fwd2(x2, task2)
    jax.block_until_ready((f2, g2))
    f2_ref, g2_ref = fg_reference(x2, task2, params)
    assert f2.shape == (N2, USER_NUM) and g2.shape == (N2,)
    assert jnp.allclose(f2, f2_ref, rtol=1e-3, atol=1e-4)
    assert jnp.allclose(g2, g2_ref, rtol=1e-3, atol=1e-4)

    # Test 3: channels-first entry point (no wrapper transposes) + bf16
    # compute path (v6e/v7x), 2-step grid.  Looser tolerance for bf16.
    x3_t = jnp.transpose(x2, (2, 1, 0))     # producer-side channels-first layout
    t3_t = task2.T
    fwd3 = jax.jit(functools.partial(fg_forward_t, params=params,
                                     compute_dtype=jnp.bfloat16))
    f3_t, g3 = fwd3(x3_t, t3_t)
    jax.block_until_ready((f3_t, g3))
    assert f3_t.shape == (USER_NUM, N2) and g3.shape == (N2,)
    assert jnp.allclose(f3_t.T, f2_ref, rtol=5e-2, atol=5e-2)
    assert jnp.allclose(g3, g2_ref, rtol=5e-2, atol=5e-2)

    print("KERNEL_OK")
</pallas_src>

<mosaic_0001>
module attributes {stable_mosaic.version = 11 : i64} {
  func.func @_fg_fused_kernel(%arg0: i32, %arg1: memref<3x20x128xf32, #tpu.memory_space<vmem>>, %arg2: memref<2x128xf32, #tpu.memory_space<vmem>>, %arg3: memref<16x12xf32, #tpu.memory_space<vmem>>, %arg4: memref<3x5xf32, #tpu.memory_space<vmem>>, %arg5: memref<20x3xf32, #tpu.memory_space<vmem>>, %arg6: memref<20x128xf32, #tpu.memory_space<vmem>>, %arg7: memref<1x128xf32, #tpu.memory_space<vmem>>) attributes {dimension_semantics = [#tpu.dimension_semantics<parallel>], iteration_bounds = array<i64: 1>, scalar_prefetch = 0 : i64, scratch_operands = 0 : i64, tpu.core_type = #tpu.core_type<tc>, window_params = [{transform_indices = @transform_0, window_bounds = array<i64: 3, 20, 128>}, {transform_indices = @transform_1, window_bounds = array<i64: 2, 128>}, {pipeline_mode = #tpu.pipeline_mode<synchronous>, transform_indices = @transform_2, window_bounds = array<i64: 16, 12>}, {pipeline_mode = #tpu.pipeline_mode<synchronous>, transform_indices = @transform_3, window_bounds = array<i64: 3, 5>}, {pipeline_mode = #tpu.pipeline_mode<synchronous>, transform_indices = @transform_4, window_bounds = array<i64: 20, 3>}, {transform_indices = @transform_5, window_bounds = array<i64: 20, 128>}, {transform_indices = @transform_6, window_bounds = array<i64: 1, 128>}]} {
    %c0 = arith.constant 0 : index
    %c0_0 = arith.constant 0 : index
    %c0_1 = arith.constant 0 : index
    %0 = vector.load %arg1[%c0, %c0_0, %c0_1] : memref<3x20x128xf32, #tpu.memory_space<vmem>>, vector<1x20x128xf32>
    %1 = vector.shape_cast %0 : vector<1x20x128xf32> to vector<20x128xf32>
    %c1 = arith.constant 1 : index
    %c0_2 = arith.constant 0 : index
    %c0_3 = arith.constant 0 : index
    %2 = vector.load %arg1[%c1, %c0_2, %c0_3] : memref<3x20x128xf32, #tpu.memory_space<vmem>>, vector<1x20x128xf32>
    %3 = vector.shape_cast %2 : vector<1x20x128xf32> to vector<20x128xf32>
    %c2 = arith.constant 2 : index
    %c0_4 = arith.constant 0 : index
    %c0_5 = arith.constant 0 : index
    %4 = vector.load %arg1[%c2, %c0_4, %c0_5] : memref<3x20x128xf32, #tpu.memory_space<vmem>>, vector<1x20x128xf32>
    %5 = vector.shape_cast %4 : vector<1x20x128xf32> to vector<20x128xf32>
    %c0_6 = arith.constant 0 : index
    %c0_7 = arith.constant 0 : index
    %6 = vector.load %arg3[%c0_6, %c0_7] : memref<16x12xf32, #tpu.memory_space<vmem>>, vector<1x1xf32>
    %7 = vector.broadcast %6 : vector<1x1xf32> to vector<20x128xf32>
    %8 = arith.mulf %1, %7 : vector<20x128xf32>
    %c0_8 = arith.constant 0 : index
    %c1_9 = arith.constant 1 : index
    %9 = vector.load %arg3[%c0_8, %c1_9] : memref<16x12xf32, #tpu.memory_space<vmem>>, vector<1x1xf32>
    %10 = vector.broadcast %9 : vector<1x1xf32> to vector<20x128xf32>
    %11 = arith.mulf %3, %10 : vector<20x128xf32>
    %12 = arith.addf %8, %11 : vector<20x128xf32>
    %c0_10 = arith.constant 0 : index
    %c2_11 = arith.constant 2 : index
    %13 = vector.load %arg3[%c0_10, %c2_11] : memref<16x12xf32, #tpu.memory_space<vmem>>, vector<1x1xf32>
    %14 = vector.broadcast %13 : vector<1x1xf32> to vector<20x128xf32>
    %15 = arith.mulf %5, %14 : vector<20x128xf32>
    %16 = arith.addf %12, %15 : vector<20x128xf32>
    %c0_12 = arith.constant 0 : index
    %c3 = arith.constant 3 : index
    %17 = vector.load %arg3[%c0_12, %c3] : memref<16x12xf32, #tpu.memory_space<vmem>>, vector<1x1xf32>
    %18 = vector.broadcast %17 : vector<1x1xf32> to vector<20x128xf32>
    %19 = arith.addf %16, %18 : vector<20x128xf32>
    %cst = arith.constant 0.000000e+00 : f32
    %20 = vector.broadcast %cst : f32 to vector<20x128xf32>
    %21 = arith.minimumf %19, %20 : vector<20x128xf32>
    %22 = math.exp %21 : vector<20x128xf32>
    %cst_13 = arith.constant 1.75809932 : f32
    %23 = vector.broadcast %cst_13 : f32 to vector<20x128xf32>
    %24 = arith.mulf %23, %22 : vector<20x128xf32>
    %cst_14 = arith.constant 1.75809932 : f32
    %25 = vector.broadcast %cst_14 : f32 to vector<20x128xf32>
    %26 = arith.subf %24, %25 : vector<20x128xf32>
    %cst_15 = arith.constant 0.000000e+00 : f32
    %27 = vector.broadcast %cst_15 : f32 to vector<20x128xf32>
    %28 = arith.cmpf ogt, %19, %27 : vector<20x128xf32>
    %cst_16 = arith.constant 1.05070102 : f32
    %29 = vector.broadcast %cst_16 : f32 to vector<20x128xf32>
    %30 = arith.mulf %29, %19 : vector<20x128xf32>
    %31 = arith.select %28, %30, %26 : vector<20x128xi1>, vector<20x128xf32>
    %c0_17 = arith.constant 0 : index
    %c4 = arith.constant 4 : index
    %32 = vector.load %arg3[%c0_17, %c4] : memref<16x12xf32, #tpu.memory_space<vmem>>, vector<1x1xf32>
    %33 = vector.broadcast %32 : vector<1x1xf32> to vector<20x128xf32>
    %34 = arith.mulf %31, %33 : vector<20x128xf32>
    %c1_18 = arith.constant 1 : index
    %c0_19 = arith.constant 0 : index
    %35 = vector.load %arg3[%c1_18, %c0_19] : memref<16x12xf32, #tpu.memory_space<vmem>>, vector<1x1xf32>
    %36 = vector.broadcast %35 : vector<1x1xf32> to vector<20x128xf32>
    %37 = arith.mulf %1, %36 : vector<20x128xf32>
    %c1_20 = arith.constant 1 : index
    %c1_21 = arith.constant 1 : index
    %38 = vector.load %arg3[%c1_20, %c1_21] : memref<16x12xf32, #tpu.memory_space<vmem>>, vector<1x1xf32>
    %39 = vector.broadcast %38 : vector<1x1xf32> to vector<20x128xf32>
    %40 = arith.mulf %3, %39 : vector<20x128xf32>
    %41 = arith.addf %37, %40 : vector<20x128xf32>
    %c1_22 = arith.constant 1 : index
    %c2_23 = arith.constant 2 : index
    %42 = vector.load %arg3[%c1_22, %c2_23] : memref<16x12xf32, #tpu.memory_space<vmem>>, vector<1x1xf32>
    %43 = vector.broadcast %42 : vector<1x1xf32> to vector<20x128xf32>
    %44 = arith.mulf %5, %43 : vector<20x128xf32>
    %45 = arith.addf %41, %44 : vector<20x128xf32>
    %c1_24 = arith.constant 1 : index
    %c3_25 = arith.constant 3 : index
    %46 = vector.load %arg3[%c1_24, %c3_25] : memref<16x12xf32, #tpu.memory_space<vmem>>, vector<1x1xf32>
    %47 = vector.broadcast %46 : vector<1x1xf32> to vector<20x128xf32>
    %48 = arith.addf %45, %47 : vector<20x128xf32>
    %cst_26 = arith.constant 0.000000e+00 : f32
    %49 = vector.broadcast %cst_26 : f32 to vector<20x128xf32>
    %50 = arith.minimumf %48, %49 : vector<20x128xf32>
    %51 = math.exp %50 : vector<20x128xf32>
    %cst_27 = arith.constant 1.75809932 : f32
    %52 = vector.broadcast %cst_27 : f32 to vector<20x128xf32>
    %53 = arith.mulf %52, %51 : vector<20x128xf32>
    %cst_28 = arith.constant 1.75809932 : f32
    %54 = vector.broadcast %cst_28 : f32 to vector<20x128xf32>
    %55 = arith.subf %53, %54 : vector<20x128xf32>
    %cst_29 = arith.constant 0.000000e+00 : f32
    %56 = vector.broadcast %cst_29 : f32 to vector<20x128xf32>
    %57 = arith.cmpf ogt, %48, %56 : vector<20x128xf32>
    %cst_30 = arith.constant 1.05070102 : f32
    %58 = vector.broadcast %cst_30 : f32 to vector<20x128xf32>
    %59 = arith.mulf %58, %48 : vector<20x128xf32>
    %60 = arith.select %57, %59, %55 : vector<20x128xi1>, vector<20x128xf32>
    %c1_31 = arith.constant 1 : index
    %c4_32 = arith.constant 4 : index
    %61 = vector.load %arg3[%c1_31, %c4_32] : memref<16x12xf32, #tpu.memory_space<vmem>>, vector<1x1xf32>
    %62 = vector.broadcast %61 : vector<1x1xf32> to vector<20x128xf32>
    %63 = arith.mulf %60, %62 : vector<20x128xf32>
    %64 = arith.addf %34, %63 : vector<20x128xf32>
    %c2_33 = arith.constant 2 : index
    %c0_34 = arith.constant 0 : index
    %65 = vector.load %arg3[%c2_33, %c0_34] : memref<16x12xf32, #tpu.memory_space<vmem>>, vector<1x1xf32>
    %66 = vector.broadcast %65 : vector<1x1xf32> to vector<20x128xf32>
    %67 = arith.mulf %1, %66 : vector<20x128xf32>
    %c2_35 = arith.constant 2 : index
    %c1_36 = arith.constant 1 : index
    %68 = vector.load %arg3[%c2_35, %c1_36] : memref<16x12xf32, #tpu.memory_space<vmem>>, vector<1x1xf32>
    %69 = vector.broadcast %68 : vector<1x1xf32> to vector<20x128xf32>
    %70 = arith.mulf %3, %69 : vector<20x128xf32>
    %71 = arith.addf %67, %70 : vector<20x128xf32>
    %c2_37 = arith.constant 2 : index
    %c2_38 = arith.constant 2 : index
    %72 = vector.load %arg3[%c2_37, %c2_38] : memref<16x12xf32, #tpu.memory_space<vmem>>, vector<1x1xf32>
    %73 = vector.broadcast %72 : vector<1x1xf32> to vector<20x128xf32>
    %74 = arith.mulf %5, %73 : vector<20x128xf32>
    %75 = arith.addf %71, %74 : vector<20x128xf32>
    %c2_39 = arith.constant 2 : index
    %c3_40 = arith.constant 3 : index
    %76 = vector.load %arg3[%c2_39, %c3_40] : memref<16x12xf32, #tpu.memory_space<vmem>>, vector<1x1xf32>
    %77 = vector.broadcast %76 : vector<1x1xf32> to vector<20x128xf32>
    %78 = arith.addf %75, %77 : vector<20x128xf32>
    %cst_41 = arith.constant 0.000000e+00 : f32
    %79 = vector.broadcast %cst_41 : f32 to vector<20x128xf32>
    %80 = arith.minimumf %78, %79 : vector<20x128xf32>
    %81 = math.exp %80 : vector<20x128xf32>
    %cst_42 = arith.constant 1.75809932 : f32
    %82 = vector.broadcast %cst_42 : f32 to vector<20x128xf32>
    %83 = arith.mulf %82, %81 : vector<20x128xf32>
    %cst_43 = arith.constant 1.75809932 : f32
    %84 = vector.broadcast %cst_43 : f32 to vector<20x128xf32>
    %85 = arith.subf %83, %84 : vector<20x128xf32>
    %cst_44 = arith.constant 0.000000e+00 : f32
    %86 = vector.broadcast %cst_44 : f32 to vector<20x128xf32>
    %87 = arith.cmpf ogt, %78, %86 : vector<20x128xf32>
    %cst_45 = arith.constant 1.05070102 : f32
    %88 = vector.broadcast %cst_45 : f32 to vector<20x128xf32>
    %89 = arith.mulf %88, %78 : vector<20x128xf32>
    %90 = arith.select %87, %89, %85 : vector<20x128xi1>, vector<20x128xf32>
    %c2_46 = arith.constant 2 : index
    %c4_47 = arith.constant 4 : index
    %91 = vector.load %arg3[%c2_46, %c4_47] : memref<16x12xf32, #tpu.memory_space<vmem>>, vector<1x1xf32>
    %92 = vector.broadcast %91 : vector<1x1xf32> to vector<20x128xf32>
    %93 = arith.mulf %90, %92 : vector<20x128xf32>
    %94 = arith.addf %64, %93 : vector<20x128xf32>
    %c3_48 = arith.constant 3 : index
    %c0_49 = arith.constant 0 : index
    %95 = vector.load %arg3[%c3_48, %c0_49] : memref<16x12xf32, #tpu.memory_space<vmem>>, vector<1x1xf32>
    %96 = vector.broadcast %95 : vector<1x1xf32> to vector<20x128xf32>
    %97 = arith.mulf %1, %96 : vector<20x128xf32>
    %c3_50 = arith.constant 3 : index
    %c1_51 = arith.constant 1 : index
    %98 = vector.load %arg3[%c3_50, %c1_51] : memref<16x12xf32, #tpu.memory_space<vmem>>, vector<1x1xf32>
    %99 = vector.broadcast %98 : vector<1x1xf32> to vector<20x128xf32>
    %100 = arith.mulf %3, %99 : vector<20x128xf32>
    %101 = arith.addf %97, %100 : vector<20x128xf32>
    %c3_52 = arith.constant 3 : index
    %c2_53 = arith.constant 2 : index
    %102 = vector.load %arg3[%c3_52, %c2_53] : memref<16x12xf32, #tpu.memory_space<vmem>>, vector<1x1xf32>
    %103 = vector.broadcast %102 : vector<1x1xf32> to vector<20x128xf32>
    %104 = arith.mulf %5, %103 : vector<20x128xf32>
    %105 = arith.addf %101, %104 : vector<20x128xf32>
    %c3_54 = arith.constant 3 : index
    %c3_55 = arith.constant 3 : index
    %106 = vector.load %arg3[%c3_54, %c3_55] : memref<16x12xf32, #tpu.memory_space<vmem>>, vector<1x1xf32>
    %107 = vector.broadcast %106 : vector<1x1xf32> to vector<20x128xf32>
    %108 = arith.addf %105, %107 : vector<20x128xf32>
    %cst_56 = arith.constant 0.000000e+00 : f32
    %109 = vector.broadcast %cst_56 : f32 to vector<20x128xf32>
    %110 = arith.minimumf %108, %109 : vector<20x128xf32>
    %111 = math.exp %110 : vector<20x128xf32>
    %cst_57 = arith.constant 1.75809932 : f32
    %112 = vector.broadcast %cst_57 : f32 to vector<20x128xf32>
    %113 = arith.mulf %112, %111 : vector<20x128xf32>
    %cst_58 = arith.constant 1.75809932 : f32
    %114 = vector.broadcast %cst_58 : f32 to vector<20x128xf32>
    %115 = arith.subf %113, %114 : vector<20x128xf32>
    %cst_59 = arith.constant 0.000000e+00 : f32
    %116 = vector.broadcast %cst_59 : f32 to vector<20x128xf32>
    %117 = arith.cmpf ogt, %108, %116 : vector<20x128xf32>
    %cst_60 = arith.constant 1.05070102 : f32
    %118 = vector.broadcast %cst_60 : f32 to vector<20x128xf32>
    %119 = arith.mulf %118, %108 : vector<20x128xf32>
    %120 = arith.select %117, %119, %115 : vector<20x128xi1>, vector<20x128xf32>
    %c3_61 = arith.constant 3 : index
    %c4_62 = arith.constant 4 : index
    %121 = vector.load %arg3[%c3_61, %c4_62] : memref<16x12xf32, #tpu.memory_space<vmem>>, vector<1x1xf32>
    %122 = vector.broadcast %121 : vector<1x1xf32> to vector<20x128xf32>
    %123 = arith.mulf %120, %122 : vector<20x128xf32>
    %124 = arith.addf %94, %123 : vector<20x128xf32>
    %c4_63 = arith.constant 4 : index
    %c0_64 = arith.constant 0 : index
    %125 = vector.load %arg3[%c4_63, %c0_64] : memref<16x12xf32, #tpu.memory_space<vmem>>, vector<1x1xf32>
    %126 = vector.broadcast %125 : vector<1x1xf32> to vector<20x128xf32>
    %127 = arith.mulf %1, %126 : vector<20x128xf32>
    %c4_65 = arith.constant 4 : index
    %c1_66 = arith.constant 1 : index
    %128 = vector.load %arg3[%c4_65, %c1_66] : memref<16x12xf32, #tpu.memory_space<vmem>>, vector<1x1xf32>
    %129 = vector.broadcast %128 : vector<1x1xf32> to vector<20x128xf32>
    %130 = arith.mulf %3, %129 : vector<20x128xf32>
    %131 = arith.addf %127, %130 : vector<20x128xf32>
    %c4_67 = arith.constant 4 : index
    %c2_68 = arith.constant 2 : index
    %132 = vector.load %arg3[%c4_67, %c2_68] : memref<16x12xf32, #tpu.memory_space<vmem>>, vector<1x1xf32>
    %133 = vector.broadcast %132 : vector<1x1xf32> to vector<20x128xf32>
    %134 = arith.mulf %5, %133 : vector<20x128xf32>
    %135 = arith.addf %131, %134 : vector<20x128xf32>
    %c4_69 = arith.constant 4 : index
    %c3_70 = arith.constant 3 : index
    %136 = vector.load %arg3[%c4_69, %c3_70] : memref<16x12xf32, #tpu.memory_space<vmem>>, vector<1x1xf32>
    %137 = vector.broadcast %136 : vector<1x1xf32> to vector<20x128xf32>
    %138 = arith.addf %135, %137 : vector<20x128xf32>
    %cst_71 = arith.constant 0.000000e+00 : f32
    %139 = vector.broadcast %cst_71 : f32 to vector<20x128xf32>
    %140 = arith.minimumf %138, %139 : vector<20x128xf32>
    %141 = math.exp %140 : vector<20x128xf32>
    %cst_72 = arith.constant 1.75809932 : f32
    %142 = vector.broadcast %cst_72 : f32 to vector<20x128xf32>
    %143 = arith.mulf %142, %141 : vector<20x128xf32>
    %cst_73 = arith.constant 1.75809932 : f32
    %144 = vector.broadcast %cst_73 : f32 to vector<20x128xf32>
    %145 = arith.subf %143, %144 : vector<20x128xf32>
    %cst_74 = arith.constant 0.000000e+00 : f32
    %146 = vector.broadcast %cst_74 : f32 to vector<20x128xf32>
    %147 = arith.cmpf ogt, %138, %146 : vector<20x128xf32>
    %cst_75 = arith.constant 1.05070102 : f32
    %148 = vector.broadcast %cst_75 : f32 to vector<20x128xf32>
    %149 = arith.mulf %148, %138 : vector<20x128xf32>
    %150 = arith.select %147, %149, %145 : vector<20x128xi1>, vector<20x128xf32>
    %c4_76 = arith.constant 4 : index
    %c4_77 = arith.constant 4 : index
    %151 = vector.load %arg3[%c4_76, %c4_77] : memref<16x12xf32, #tpu.memory_space<vmem>>, vector<1x1xf32>
    %152 = vector.broadcast %151 : vector<1x1xf32> to vector<20x128xf32>
    %153 = arith.mulf %150, %152 : vector<20x128xf32>
    %154 = arith.addf %124, %153 : vector<20x128xf32>
    %c5 = arith.constant 5 : index
    %c0_78 = arith.constant 0 : index
    %155 = vector.load %arg3[%c5, %c0_78] : memref<16x12xf32, #tpu.memory_space<vmem>>, vector<1x1xf32>
    %156 = vector.broadcast %155 : vector<1x1xf32> to vector<20x128xf32>
    %157 = arith.mulf %1, %156 : vector<20x128xf32>
    %c5_79 = arith.constant 5 : index
    %c1_80 = arith.constant 1 : index
    %158 = vector.load %arg3[%c5_79, %c1_80] : memref<16x12xf32, #tpu.memory_space<vmem>>, vector<1x1xf32>
    %159 = vector.broadcast %158 : vector<1x1xf32> to vector<20x128xf32>
    %160 = arith.mulf %3, %159 : vector<20x128xf32>
    %161 = arith.addf %157, %160 : vector<20x128xf32>
    %c5_81 = arith.constant 5 : index
    %c2_82 = arith.constant 2 : index
    %162 = vector.load %arg3[%c5_81, %c2_82] : memref<16x12xf32, #tpu.memory_space<vmem>>, vector<1x1xf32>
    %163 = vector.broadcast %162 : vector<1x1xf32> to vector<20x128xf32>
    %164 = arith.mulf %5, %163 : vector<20x128xf32>
    %165 = arith.addf %161, %164 : vector<20x128xf32>
    %c5_83 = arith.constant 5 : index
    %c3_84 = arith.constant 3 : index
    %166 = vector.load %arg3[%c5_83, %c3_84] : memref<16x12xf32, #tpu.memory_space<vmem>>, vector<1x1xf32>
    %167 = vector.broadcast %166 : vector<1x1xf32> to vector<20x128xf32>
    %168 = arith.addf %165, %167 : vector<20x128xf32>
    %cst_85 = arith.constant 0.000000e+00 : f32
    %169 = vector.broadcast %cst_85 : f32 to vector<20x128xf32>
    %170 = arith.minimumf %168, %169 : vector<20x128xf32>
    %171 = math.exp %170 : vector<20x128xf32>
    %cst_86 = arith.constant 1.75809932 : f32
    %172 = vector.broadcast %cst_86 : f32 to vector<20x128xf32>
    %173 = arith.mulf %172, %171 : vector<20x128xf32>
    %cst_87 = arith.constant 1.75809932 : f32
    %174 = vector.broadcast %cst_87 : f32 to vector<20x128xf32>
    %175 = arith.subf %173, %174 : vector<20x128xf32>
    %cst_88 = arith.constant 0.000000e+00 : f32
    %176 = vector.broadcast %cst_88 : f32 to vector<20x128xf32>
    %177 = arith.cmpf ogt, %168, %176 : vector<20x128xf32>
    %cst_89 = arith.constant 1.05070102 : f32
    %178 = vector.broadcast %cst_89 : f32 to vector<20x128xf32>
    %179 = arith.mulf %178, %168 : vector<20x128xf32>
    %180 = arith.select %177, %179, %175 : vector<20x128xi1>, vector<20x128xf32>
    %c5_90 = arith.constant 5 : index
    %c4_91 = arith.constant 4 : index
    %181 = vector.load %arg3[%c5_90, %c4_91] : memref<16x12xf32, #tpu.memory_space<vmem>>, vector<1x1xf32>
    %182 = vector.broadcast %181 : vector<1x1xf32> to vector<20x128xf32>
    %183 = arith.mulf %180, %182 : vector<20x128xf32>
    %184 = arith.addf %154, %183 : vector<20x128xf32>
    %c6 = arith.constant 6 : index
    %c0_92 = arith.constant 0 : index
    %185 = vector.load %arg3[%c6, %c0_92] : memref<16x12xf32, #tpu.memory_space<vmem>>, vector<1x1xf32>
    %186 = vector.broadcast %185 : vector<1x1xf32> to vector<20x128xf32>
    %187 = arith.mulf %1, %186 : vector<20x128xf32>
    %c6_93 = arith.constant 6 : index
    %c1_94 = arith.constant 1 : index
    %188 = vector.load %arg3[%c6_93, %c1_94] : memref<16x12xf32, #tpu.memory_space<vmem>>, vector<1x1xf32>
    %189 = vector.broadcast %188 : vector<1x1xf32> to vector<20x128xf32>
    %190 = arith.mulf %3, %189 : vector<20x128xf32>
    %191 = arith.addf %187, %190 : vector<20x128xf32>
    %c6_95 = arith.constant 6 : index
    %c2_96 = arith.constant 2 : index
    %192 = vector.load %arg3[%c6_95, %c2_96] : memref<16x12xf32, #tpu.memory_space<vmem>>, vector<1x1xf32>
    %193 = vector.broadcast %192 : vector<1x1xf32> to vector<20x128xf32>
    %194 = arith.mulf %5, %193 : vector<20x128xf32>
    %195 = arith.addf %191, %194 : vector<20x128xf32>
    %c6_97 = arith.constant 6 : index
    %c3_98 = arith.constant 3 : index
    %196 = vector.load %arg3[%c6_97, %c3_98] : memref<16x12xf32, #tpu.memory_space<vmem>>, vector<1x1xf32>
    %197 = vector.broadcast %196 : vector<1x1xf32> to vector<20x128xf32>
    %198 = arith.addf %195, %197 : vector<20x128xf32>
    %cst_99 = arith.constant 0.000000e+00 : f32
    %199 = vector.broadcast %cst_99 : f32 to vector<20x128xf32>
    %200 = arith.minimumf %198, %199 : vector<20x128xf32>
    %201 = math.exp %200 : vector<20x128xf32>
    %cst_100 = arith.constant 1.75809932 : f32
    %202 = vector.broadcast %cst_100 : f32 to vector<20x128xf32>
    %203 = arith.mulf %202, %201 : vector<20x128xf32>
    %cst_101 = arith.constant 1.75809932 : f32
    %204 = vector.broadcast %cst_101 : f32 to vector<20x128xf32>
    %205 = arith.subf %203, %204 : vector<20x128xf32>
    %cst_102 = arith.constant 0.000000e+00 : f32
    %206 = vector.broadcast %cst_102 : f32 to vector<20x128xf32>
    %207 = arith.cmpf ogt, %198, %206 : vector<20x128xf32>
    %cst_103 = arith.constant 1.05070102 : f32
    %208 = vector.broadcast %cst_103 : f32 to vector<20x128xf32>
    %209 = arith.mulf %208, %198 : vector<20x128xf32>
    %210 = arith.select %207, %209, %205 : vector<20x128xi1>, vector<20x128xf32>
    %c6_104 = arith.constant 6 : index
    %c4_105 = arith.constant 4 : index
    %211 = vector.load %arg3[%c6_104, %c4_105] : memref<16x12xf32, #tpu.memory_space<vmem>>, vector<1x1xf32>
    %212 = vector.broadcast %211 : vector<1x1xf32> to vector<20x128xf32>
    %213 = arith.mulf %210, %212 : vector<20x128xf32>
    %214 = arith.addf %184, %213 : vector<20x128xf32>
    %c7 = arith.constant 7 : index
    %c0_106 = arith.constant 0 : index
    %215 = vector.load %arg3[%c7, %c0_106] : memref<16x12xf32, #tpu.memory_space<vmem>>, vector<1x1xf32>
    %216 = vector.broadcast %215 : vector<1x1xf32> to vector<20x128xf32>
    %217 = arith.mulf %1, %216 : vector<20x128xf32>
    %c7_107 = arith.constant 7 : index
    %c1_108 = arith.constant 1 : index
    %218 = vector.load %arg3[%c7_107, %c1_108] : memref<16x12xf32, #tpu.memory_space<vmem>>, vector<1x1xf32>
    %219 = vector.broadcast %218 : vector<1x1xf32> to vector<20x128xf32>
    %220 = arith.mulf %3, %219 : vector<20x128xf32>
    %221 = arith.addf %217, %220 : vector<20x128xf32>
    %c7_109 = arith.constant 7 : index
    %c2_110 = arith.constant 2 : index
    %222 = vector.load %arg3[%c7_109, %c2_110] : memref<16x12xf32, #tpu.memory_space<vmem>>, vector<1x1xf32>
    %223 = vector.broadcast %222 : vector<1x1xf32> to vector<20x128xf32>
    %224 = arith.mulf %5, %223 : vector<20x128xf32>
    %225 = arith.addf %221, %224 : vector<20x128xf32>
    %c7_111 = arith.constant 7 : index
    %c3_112 = arith.constant 3 : index
    %226 = vector.load %arg3[%c7_111, %c3_112] : memref<16x12xf32, #tpu.memory_space<vmem>>, vector<1x1xf32>
    %227 = vector.broadcast %226 : vector<1x1xf32> to vector<20x128xf32>
    %228 = arith.addf %225, %227 : vector<20x128xf32>
    %cst_113 = arith.constant 0.000000e+00 : f32
    %229 = vector.broadcast %cst_113 : f32 to vector<20x128xf32>
    %230 = arith.minimumf %228, %229 : vector<20x128xf32>
    %231 = math.exp %230 : vector<20x128xf32>
    %cst_114 = arith.constant 1.75809932 : f32
    %232 = vector.broadcast %cst_114 : f32 to vector<20x128xf32>
    %233 = arith.mulf %232, %231 : vector<20x128xf32>
    %cst_115 = arith.constant 1.75809932 : f32
    %234 = vector.broadcast %cst_115 : f32 to vector<20x128xf32>
    %235 = arith.subf %233, %234 : vector<20x128xf32>
    %cst_116 = arith.constant 0.000000e+00 : f32
    %236 = vector.broadcast %cst_116 : f32 to vector<20x128xf32>
    %237 = arith.cmpf ogt, %228, %236 : vector<20x128xf32>
    %cst_117 = arith.constant 1.05070102 : f32
    %238 = vector.broadcast %cst_117 : f32 to vector<20x128xf32>
    %239 = arith.mulf %238, %228 : vector<20x128xf32>
    %240 = arith.select %237, %239, %235 : vector<20x128xi1>, vector<20x128xf32>
    %c7_118 = arith.constant 7 : index
    %c4_119 = arith.constant 4 : index
    %241 = vector.load %arg3[%c7_118, %c4_119] : memref<16x12xf32, #tpu.memory_space<vmem>>, vector<1x1xf32>
    %242 = vector.broadcast %241 : vector<1x1xf32> to vector<20x128xf32>
    %243 = arith.mulf %240, %242 : vector<20x128xf32>
    %244 = arith.addf %214, %243 : vector<20x128xf32>
    %c0_120 = arith.constant 0 : index
    %c5_121 = arith.constant 5 : index
    %245 = vector.load %arg3[%c0_120, %c5_121] : memref<16x12xf32, #tpu.memory_space<vmem>>, vector<1x1xf32>
    %246 = vector.broadcast %245 : vector<1x1xf32> to vector<20x128xf32>
    %247 = arith.addf %244, %246 : vector<20x128xf32>
    %cst_122 = arith.constant 0.000000e+00 : f32
    %248 = vector.broadcast %cst_122 : f32 to vector<20x128xf32>
    %249 = arith.minimumf %247, %248 : vector<20x128xf32>
    %250 = math.exp %249 : vector<20x128xf32>
    %cst_123 = arith.constant 1.75809932 : f32
    %251 = vector.broadcast %cst_123 : f32 to vector<20x128xf32>
    %252 = arith.mulf %251, %250 : vector<20x128xf32>
    %cst_124 = arith.constant 1.75809932 : f32
    %253 = vector.broadcast %cst_124 : f32 to vector<20x128xf32>
    %254 = arith.subf %252, %253 : vector<20x128xf32>
    %cst_125 = arith.constant 0.000000e+00 : f32
    %255 = vector.broadcast %cst_125 : f32 to vector<20x128xf32>
    %256 = arith.cmpf ogt, %247, %255 : vector<20x128xf32>
    %cst_126 = arith.constant 1.05070102 : f32
    %257 = vector.broadcast %cst_126 : f32 to vector<20x128xf32>
    %258 = arith.mulf %257, %247 : vector<20x128xf32>
    %259 = arith.select %256, %258, %254 : vector<20x128xi1>, vector<20x128xf32>
    %c0_127 = arith.constant 0 : index
    %c0_128 = arith.constant 0 : index
    %260 = vector.load %arg6[%c0_127, %c0_128] : memref<20x128xf32, #tpu.memory_space<vmem>>, vector<20x128xf32>
    tpu.vector_store %arg6[%c0_127, %c0_128], %259 {strides = array<i32>} : memref<20x128xf32, #tpu.memory_space<vmem>>, vector<20x128xf32>,
    %c0_129 = arith.constant 0 : index
    %c0_130 = arith.constant 0 : index
    %261 = vector.load %arg2[%c0_129, %c0_130] : memref<2x128xf32, #tpu.memory_space<vmem>>, vector<1x128xf32>
    %c1_131 = arith.constant 1 : index
    %c0_132 = arith.constant 0 : index
    %262 = vector.load %arg2[%c1_131, %c0_132] : memref<2x128xf32, #tpu.memory_space<vmem>>, vector<1x128xf32>
    %c0_133 = arith.constant 0 : index
    %c6_134 = arith.constant 6 : index
    %263 = vector.load %arg3[%c0_133, %c6_134] : memref<16x12xf32, #tpu.memory_space<vmem>>, vector<16x1xf32>
    %c0_135 = arith.constant 0 : index
    %c7_136 = arith.constant 7 : index
    %264 = vector.load %arg3[%c0_135, %c7_136] : memref<16x12xf32, #tpu.memory_space<vmem>>, vector<16x1xf32>
    %c0_137 = arith.constant 0 : index
    %c8 = arith.constant 8 : index
    %265 = vector.load %arg3[%c0_137, %c8] : memref<16x12xf32, #tpu.memory_space<vmem>>, vector<16x1xf32>
    %266 = vector.broadcast %261 : vector<1x128xf32> to vector<16x128xf32>
    %267 = vector.broadcast %263 : vector<16x1xf32> to vector<16x128xf32>
    %268 = arith.mulf %266, %267 : vector<16x128xf32>
    %269 = vector.broadcast %262 : vector<1x128xf32> to vector<16x128xf32>
    %270 = vector.broadcast %264 : vector<16x1xf32> to vector<16x128xf32>
    %271 = arith.mulf %269, %270 : vector<16x128xf32>
    %272 = arith.addf %268, %271 : vector<16x128xf32>
    %273 = vector.broadcast %265 : vector<16x1xf32> to vector<16x128xf32>
    %274 = arith.addf %272, %273 : vector<16x128xf32>
    %cst_138 = arith.constant 0.000000e+00 : f32
    %275 = vector.broadcast %cst_138 : f32 to vector<16x128xf32>
    %276 = arith.minimumf %274, %275 : vector<16x128xf32>
    %277 = math.exp %276 : vector<16x128xf32>
    %cst_139 = arith.constant 1.75809932 : f32
    %278 = vector.broadcast %cst_139 : f32 to vector<16x128xf32>
    %279 = arith.mulf %278, %277 : vector<16x128xf32>
    %cst_140 = arith.constant 1.75809932 : f32
    %280 = vector.broadcast %cst_140 : f32 to vector<16x128xf32>
    %281 = arith.subf %279, %280 : vector<16x128xf32>
    %cst_141 = arith.constant 0.000000e+00 : f32
    %282 = vector.broadcast %cst_141 : f32 to vector<16x128xf32>
    %283 = arith.cmpf ogt, %274, %282 : vector<16x128xf32>
    %cst_142 = arith.constant 1.05070102 : f32
    %284 = vector.broadcast %cst_142 : f32 to vector<16x128xf32>
    %285 = arith.mulf %284, %274 : vector<16x128xf32>
    %286 = arith.select %283, %285, %281 : vector<16x128xi1>, vector<16x128xf32>
    %c0_143 = arith.constant 0 : index
    %c9 = arith.constant 9 : index
    %287 = vector.load %arg3[%c0_143, %c9] : memref<16x12xf32, #tpu.memory_space<vmem>>, vector<16x1xf32>
    %c0_144 = arith.constant 0 : index
    %c10 = arith.constant 10 : index
    %288 = vector.load %arg3[%c0_144, %c10] : memref<16x12xf32, #tpu.memory_space<vmem>>, vector<16x1xf32>
    %289 = vector.broadcast %287 : vector<16x1xf32> to vector<16x128xf32>
    %290 = arith.mulf %286, %289 : vector<16x128xf32>
    %cst_145 = arith.constant dense<0.000000e+00> : vector<128xf32>
    %291 = vector.multi_reduction <add>, %290, %cst_145 [0] : vector<16x128xf32> to vector<128xf32>
    %292 = vector.shape_cast %291 : vector<128xf32> to vector<1x128xf32>
    %c0_146 = arith.constant 0 : index
    %c11 = arith.constant 11 : index
    %293 = vector.load %arg3[%c0_146, %c11] : memref<16x12xf32, #tpu.memory_space<vmem>>, vector<1x1xf32>
    %294 = vector.broadcast %293 : vector<1x1xf32> to vector<1x128xf32>
    %295 = arith.addf %292, %294 : vector<1x128xf32>
    %cst_147 = arith.constant 0.000000e+00 : f32
    %296 = vector.broadcast %cst_147 : f32 to vector<1x128xf32>
    %297 = arith.minimumf %295, %296 : vector<1x128xf32>
    %298 = math.exp %297 : vector<1x128xf32>
    %cst_148 = arith.constant 1.75809932 : f32
    %299 = vector.broadcast %cst_148 : f32 to vector<1x128xf32>
    %300 = arith.mulf %299, %298 : vector<1x128xf32>
    %cst_149 = arith.constant 1.75809932 : f32
    %301 = vector.broadcast %cst_149 : f32 to vector<1x128xf32>
    %302 = arith.subf %300, %301 : vector<1x128xf32>
    %cst_150 = arith.constant 0.000000e+00 : f32
    %303 = vector.broadcast %cst_150 : f32 to vector<1x128xf32>
    %304 = arith.cmpf ogt, %295, %303 : vector<1x128xf32>
    %cst_151 = arith.constant 1.05070102 : f32
    %305 = vector.broadcast %cst_151 : f32 to vector<1x128xf32>
    %306 = arith.mulf %305, %295 : vector<1x128xf32>
    %307 = arith.select %304, %306, %302 : vector<1x128xi1>, vector<1x128xf32>
    %308 = vector.broadcast %288 : vector<16x1xf32> to vector<16x128xf32>
    %309 = arith.mulf %286, %308 : vector<16x128xf32>
    %cst_152 = arith.constant dense<0.000000e+00> : vector<128xf32>
    %310 = vector.multi_reduction <add>, %309, %cst_152 [0] : vector<16x128xf32> to vector<128xf32>
    %311 = vector.shape_cast %310 : vector<128xf32> to vector<1x128xf32>
    %c1_153 = arith.constant 1 : index
    %c11_154 = arith.constant 11 : index
    %312 = vector.load %arg3[%c1_153, %c11_154] : memref<16x12xf32, #tpu.memory_space<vmem>>, vector<1x1xf32>
    %313 = vector.broadcast %312 : vector<1x1xf32> to vector<1x128xf32>
    %314 = arith.addf %311, %313 : vector<1x128xf32>
    %cst_155 = arith.constant 0.000000e+00 : f32
    %315 = vector.broadcast %cst_155 : f32 to vector<1x128xf32>
    %316 = arith.minimumf %314, %315 : vector<1x128xf32>
    %317 = math.exp %316 : vector<1x128xf32>
    %cst_156 = arith.constant 1.75809932 : f32
    %318 = vector.broadcast %cst_156 : f32 to vector<1x128xf32>
    %319 = arith.mulf %318, %317 : vector<1x128xf32>
    %cst_157 = arith.constant 1.75809932 : f32
    %320 = vector.broadcast %cst_157 : f32 to vector<1x128xf32>
    %321 = arith.subf %319, %320 : vector<1x128xf32>
    %cst_158 = arith.constant 0.000000e+00 : f32
    %322 = vector.broadcast %cst_158 : f32 to vector<1x128xf32>
    %323 = arith.cmpf ogt, %314, %322 : vector<1x128xf32>
    %cst_159 = arith.constant 1.05070102 : f32
    %324 = vector.broadcast %cst_159 : f32 to vector<1x128xf32>
    %325 = arith.mulf %324, %314 : vector<1x128xf32>
    %326 = arith.select %323, %325, %321 : vector<1x128xi1>, vector<1x128xf32>
    %c0_160 = arith.constant 0 : index
    %c0_161 = arith.constant 0 : index
    %327 = vector.load %arg5[%c0_160, %c0_161] : memref<20x3xf32, #tpu.memory_space<vmem>>, vector<20x1xf32>
    %328 = vector.broadcast %327 : vector<20x1xf32> to vector<20x128xf32>
    %329 = arith.mulf %259, %328 : vector<20x128xf32>
    %cst_162 = arith.constant dense<0.000000e+00> : vector<128xf32>
    %330 = vector.multi_reduction <add>, %329, %cst_162 [0] : vector<20x128xf32> to vector<128xf32>
    %331 = vector.shape_cast %330 : vector<128xf32> to vector<1x128xf32>
    %c0_163 = arith.constant 0 : index
    %c1_164 = arith.constant 1 : index
    %332 = vector.load %arg5[%c0_163, %c1_164] : memref<20x3xf32, #tpu.memory_space<vmem>>, vector<20x1xf32>
    %333 = vector.broadcast %332 : vector<20x1xf32> to vector<20x128xf32>
    %334 = arith.mulf %259, %333 : vector<20x128xf32>
    %cst_165 = arith.constant dense<0.000000e+00> : vector<128xf32>
    %335 = vector.multi_reduction <add>, %334, %cst_165 [0] : vector<20x128xf32> to vector<128xf32>
    %336 = vector.shape_cast %335 : vector<128xf32> to vector<1x128xf32>
    %c0_166 = arith.constant 0 : index
    %c2_167 = arith.constant 2 : index
    %337 = vector.load %arg5[%c0_166, %c2_167] : memref<20x3xf32, #tpu.memory_space<vmem>>, vector<20x1xf32>
    %338 = vector.broadcast %337 : vector<20x1xf32> to vector<20x128xf32>
    %339 = arith.mulf %259, %338 : vector<20x128xf32>
    %cst_168 = arith.constant dense<0.000000e+00> : vector<128xf32>
    %340 = vector.multi_reduction <add>, %339, %cst_168 [0] : vector<20x128xf32> to vector<128xf32>
    %341 = vector.shape_cast %340 : vector<128xf32> to vector<1x128xf32>
    %342 = tpu.concatenate %331, %336, %341 in 0 : vector<1x128xf32>, vector<1x128xf32>, vector<1x128xf32> -> vector<3x128xf32>
    %c0_169 = arith.constant 0 : index
    %c0_170 = arith.constant 0 : index
    %343 = vector.load %arg4[%c0_169, %c0_170] : memref<3x5xf32, #tpu.memory_space<vmem>>, vector<3x1xf32>
    %c0_171 = arith.constant 0 : index
    %c1_172 = arith.constant 1 : index
    %344 = vector.load %arg4[%c0_171, %c1_172] : memref<3x5xf32, #tpu.memory_space<vmem>>, vector<3x1xf32>
    %c0_173 = arith.constant 0 : index
    %c2_174 = arith.constant 2 : index
    %345 = vector.load %arg4[%c0_173, %c2_174] : memref<3x5xf32, #tpu.memory_space<vmem>>, vector<3x1xf32>
    %c0_175 = arith.constant 0 : index
    %c3_176 = arith.constant 3 : index
    %346 = vector.load %arg4[%c0_175, %c3_176] : memref<3x5xf32, #tpu.memory_space<vmem>>, vector<3x1xf32>
    %347 = vector.broadcast %307 : vector<1x128xf32> to vector<3x128xf32>
    %348 = vector.broadcast %343 : vector<3x1xf32> to vector<3x128xf32>
    %349 = arith.mulf %347, %348 : vector<3x128xf32>
    %350 = arith.addf %342, %349 : vector<3x128xf32>
    %351 = vector.broadcast %326 : vector<1x128xf32> to vector<3x128xf32>
    %352 = vector.broadcast %344 : vector<3x1xf32> to vector<3x128xf32>
    %353 = arith.mulf %351, %352 : vector<3x128xf32>
    %354 = arith.addf %350, %353 : vector<3x128xf32>
    %355 = vector.broadcast %345 : vector<3x1xf32> to vector<3x128xf32>
    %356 = arith.addf %354, %355 : vector<3x128xf32>
    %cst_177 = arith.constant 0.000000e+00 : f32
    %357 = vector.broadcast %cst_177 : f32 to vector<3x128xf32>
    %358 = arith.minimumf %356, %357 : vector<3x128xf32>
    %359 = math.exp %358 : vector<3x128xf32>
    %cst_178 = arith.constant 1.75809932 : f32
    %360 = vector.broadcast %cst_178 : f32 to vector<3x128xf32>
    %361 = arith.mulf %360, %359 : vector<3x128xf32>
    %cst_179 = arith.constant 1.75809932 : f32
    %362 = vector.broadcast %cst_179 : f32 to vector<3x128xf32>
    %363 = arith.subf %361, %362 : vector<3x128xf32>
    %cst_180 = arith.constant 0.000000e+00 : f32
    %364 = vector.broadcast %cst_180 : f32 to vector<3x128xf32>
    %365 = arith.cmpf ogt, %356, %364 : vector<3x128xf32>
    %cst_181 = arith.constant 1.05070102 : f32
    %366 = vector.broadcast %cst_181 : f32 to vector<3x128xf32>
    %367 = arith.mulf %366, %356 : vector<3x128xf32>
    %368 = arith.select %365, %367, %363 : vector<3x128xi1>, vector<3x128xf32>
    %369 = vector.broadcast %346 : vector<3x1xf32> to vector<3x128xf32>
    %370 = arith.mulf %368, %369 : vector<3x128xf32>
    %cst_182 = arith.constant dense<0.000000e+00> : vector<128xf32>
    %371 = vector.multi_reduction <add>, %370, %cst_182 [0] : vector<3x128xf32> to vector<128xf32>
    %372 = vector.shape_cast %371 : vector<128xf32> to vector<1x128xf32>
    %c0_183 = arith.constant 0 : index
    %c4_184 = arith.constant 4 : index
    %373 = vector.load %arg4[%c0_183, %c4_184] : memref<3x5xf32, #tpu.memory_space<vmem>>, vector<1x1xf32>
    %374 = vector.broadcast %373 : vector<1x1xf32> to vector<1x128xf32>
    %375 = arith.addf %372, %374 : vector<1x128xf32>
    %c0_185 = arith.constant 0 : index
    %c0_186 = arith.constant 0 : index
    %376 = vector.load %arg7[%c0_185, %c0_186] : memref<1x128xf32, #tpu.memory_space<vmem>>, vector<1x128xf32>
    tpu.vector_store %arg7[%c0_185, %c0_186], %375 {strides = array<i32>} : memref<1x128xf32, #tpu.memory_space<vmem>>, vector<1x128xf32>,
    return
  }
  func.func @transform_0(%arg0: i32) -> (i32, i32, i32) {
    %c0_i32 = arith.constant 0 : i32
    %c0_i32_0 = arith.constant 0 : i32
    %c0_i32_1 = arith.constant 0 : i32
    return %c0_i32, %c0_i32_0, %arg0 : i32, i32, i32
  }
  func.func @transform_1(%arg0: i32) -> (i32, i32) {
    %c0_i32 = arith.constant 0 : i32
    %c0_i32_0 = arith.constant 0 : i32
    return %c0_i32, %arg0 : i32, i32
  }
  func.func @transform_2(%arg0: i32) -> (i32, i32) {
    %c0_i32 = arith.constant 0 : i32
    %c0_i32_0 = arith.constant 0 : i32
    %c0_i32_1 = arith.constant 0 : i32
    return %c0_i32, %c0_i32_0 : i32, i32
  }
  func.func @transform_3(%arg0: i32) -> (i32, i32) {
    %c0_i32 = arith.constant 0 : i32
    %c0_i32_0 = arith.constant 0 : i32
    %c0_i32_1 = arith.constant 0 : i32
    return %c0_i32, %c0_i32_0 : i32, i32
  }
  func.func @transform_4(%arg0: i32) -> (i32, i32) {
    %c0_i32 = arith.constant 0 : i32
    %c0_i32_0 = arith.constant 0 : i32
    %c0_i32_1 = arith.constant 0 : i32
    return %c0_i32, %c0_i32_0 : i32, i32
  }
  func.func @transform_5(%arg0: i32) -> (i32, i32) {
    %c0_i32 = arith.constant 0 : i32
    %c0_i32_0 = arith.constant 0 : i32
    return %c0_i32, %arg0 : i32, i32
  }
  func.func @transform_6(%arg0: i32) -> (i32, i32) {
    %c0_i32 = arith.constant 0 : i32
    %c0_i32_0 = arith.constant 0 : i32
    return %c0_i32, %arg0 : i32, i32
  }
}

</mosaic_0001>

<llo_original>
// kernel: fg_forward.1
$region0: #{fg_forward.1}
  #allocation0 [shape = 'u32[]', space=smem, size = 0x4, offset = 0x4, fixed_abs, tag = 'smem constant byte address 0x4 - core index']
  #allocation1 [shape = 'u32[72,128]{1,0:T(1,128)}', space=vmem, size = 0x9000, scoped, tag = 'internal scratch']
  %s0 = inlined_call_operand.vmem [shape: f32[3,20,128], index: 0, kind: input, shape index: {}]
  %s1 = inlined_call_operand.vmem [shape: f32[2,128], index: 1, kind: input, shape index: {}]
  %s2 = inlined_call_operand.vmem [shape: f32[16,12], index: 2, kind: input, shape index: {}]
  %s3 = inlined_call_operand.vmem [shape: f32[3,5], index: 3, kind: input, shape index: {}]
  %s4 = inlined_call_operand.vmem [shape: f32[20,3], index: 4, kind: input, shape index: {}]
  %s5 = inlined_call_operand.vmem [shape: f32[20,128], index: 5, kind: output, shape index: {0}]
  %s6 = inlined_call_operand.vmem [shape: f32[1,128], index: 6, kind: output, shape index: {1}]
  %7 = xla_tuple %s5, %s6
  %s8 = sld [smem:[#allocation0]]
  $region38: #{fg_forward.1} parent=0
    _
  %s10 = ssub.s32 1, %s8
  %s11 = scalar_select 0, %s10, %s8
  // Predicated region
  $region2: #{fg_forward.1} parent=0 // pred_check
    _
  $region3: #{fg_forward.1} parent=0 // pred_check_branch
    %13 = sbr.rel (0) target = $region5
  $region4: #{fg_forward.1} parent=0 // pred_region
    _
  $region5: #{fg_forward.1} parent=0 // pred_fallthru
    _
  // Predicated region
  $region6: #{fg_forward.1} parent=0 // pred_check
    _
  $region7: #{fg_forward.1} parent=0 // pred_check_branch
    %15 = sbr.rel (0) target = $region9
  $region8: #{fg_forward.1} parent=0 // pred_region
    _
  $region9: #{fg_forward.1} parent=0 // pred_fallthru
    _
  // Predicated region
  $region10: #{fg_forward.1} parent=0 // pred_check
    _
  $region11: #{fg_forward.1} parent=0 // pred_check_branch
    %17 = sbr.rel (0) target = $region13
  $region12: #{fg_forward.1} parent=0 // pred_region
    _
  $region13: #{fg_forward.1} parent=0 // pred_fallthru
    _
  // Predicated region
  $region14: #{fg_forward.1} parent=0 // pred_check
    _
  $region15: #{fg_forward.1} parent=0 // pred_check_branch
    %19 = sbr.rel (0) target = $region17
  $region16: #{fg_forward.1} parent=0 // pred_region
    _
  $region17: #{fg_forward.1} parent=0 // pred_fallthru
    _
  // Predicated region
  $region18: #{fg_forward.1} parent=0 // pred_check
    _
  $region19: #{fg_forward.1} parent=0 // pred_check_branch
    %21 = sbr.rel (0) target = $region21
  $region20: #{fg_forward.1} parent=0 // pred_region
    _
  $region21: #{fg_forward.1} parent=0 // pred_fallthru
    _
  %v22 = vld [vmem:[%s0] sm:$0xff]
  %v23 = vld [vmem:[%s0 + $0x8] sm:$0xff]
  %v24 = vld [vmem:[%s0 + $0x10] sm:$0xf]
  %s25 = scalar_lea.vmem %s0, 24
  %v26 = vld [vmem:[%s25] sm:$0xff]
  %v27 = vld [vmem:[%s25 + $0x8] sm:$0xff]
  %v28 = vld [vmem:[%s25 + $0x10] sm:$0xf]
  %s29 = scalar_lea.vmem %s0, 48
  %v30 = vld [vmem:[%s29] sm:$0xff]
  %v31 = vld [vmem:[%s29 + $0x8] sm:$0xff]
  %v32 = vld [vmem:[%s29 + $0x10] sm:$0xf]
  %v33 = vld [vmem:[%s2] sm:$0x1]
  %s35 = vtos %v33
  %v36 = vstv %s35
  %v38 = vmul.f32 %v22, %v36
  %v39 = vmul.f32 %v23, %v36
  %v40 = vmul.f32 %v24, %v36
  %41 = vrot.lane.b32.xlu0 %v33, 127
  %v42 = vpop.permute.xlu0 %41
  %s43 = vtos %v42
  %v44 = vstv %s43
  %v46 = vmul.f32 %v26, %v44
  %v47 = vmul.f32 %v27, %v44
  %v48 = vmul.f32 %v28, %v44
  %v49 = vadd.f32 %v38, %v46
  %v50 = vadd.f32 %v39, %v47
  %v51 = vadd.f32 %v40, %v48
  %52 = vrot.lane.b32.xlu0 %v33, 126
  %v53 = vpop.permute.xlu0 %52
  %s54 = vtos %v53
  %v55 = vstv %s54
  %v57 = vmul.f32 %v30, %v55
  %v58 = vmul.f32 %v31, %v55
  %v59 = vmul.f32 %v32, %v55
  %v60 = vadd.f32 %v49, %v57
  %v61 = vadd.f32 %v50, %v58
  %v62 = vadd.f32 %v51, %v59
  %63 = vrot.lane.b32.xlu0 %v33, 125
  %v64 = vpop.permute.xlu0 %63
  %s65 = vtos %v64
  %v66 = vstv %s65
  %v68 = vadd.f32 %v60, %v66
  %v69 = vadd.f32 %v61, %v66
  %v70 = vadd.f32 %v62, %v66
  %v71 = vmin.f32 %v68, 0.0
  %v72 = vmin.f32 %v69, 0.0
  %v73 = vmin.f32 %v70, 0.0
  %v74 = vmul.f32 %v71, 1.442695
  %v75 = vpow.pop %v74
  %v76 = vmul.f32 %v72, 1.442695
  %v77 = vpow.pop %v76
  %v78 = vmul.f32 %v73, 1.442695
  %v79 = vpow.pop %v78
  %v80 = vmul.f32 %v75, 1.7580993
  %v81 = vmul.f32 %v77, 1.7580993
  %v82 = vmul.f32 %v79, 1.7580993
  %v83 = vsub.f32 %v80, 1.7580993
  %v84 = vsub.f32 %v81, 1.7580993
  %v85 = vsub.f32 %v82, 1.7580993
  %vm86 = vcmp.gt.f32.partialorder %v68, 0.0
  %vm87 = vcmp.gt.f32.partialorder %v69, 0.0
  %vm88 = vcmp.gt.f32.partialorder %v70, 0.0
  %v89 = vmul.f32 %v68, 1.050701
  %v90 = vmul.f32 %v69, 1.050701
  %v91 = vmul.f32 %v70, 1.050701
  %v92 = vsel %vm86, %v89, %v83
  %v93 = vsel %vm87, %v90, %v84
  %v94 = vsel %vm88, %v91, %v85
  %95 = vrot.lane.b32.xlu0 %v33, 124
  %v96 = vpop.permute.xlu0 %95
  %s97 = vtos %v96
  %v98 = vstv %s97
  %v100 = vmul.f32 %v92, %v98
  %v101 = vmul.f32 %v93, %v98
  %v102 = vmul.f32 %v94, %v98
  %v103 = vld [vmem:[%s2 + $0x1] sm:$0x1]
  %s105 = vtos %v103
  %v106 = vstv %s105
  %v108 = vmul.f32 %v22, %v106
  %v109 = vmul.f32 %v23, %v106
  %v110 = vmul.f32 %v24, %v106
  %111 = vrot.lane.b32.xlu0 %v103, 127
  %v112 = vpop.permute.xlu0 %111
  %s113 = vtos %v112
  %v114 = vstv %s113
  %v116 = vmul.f32 %v26, %v114
  %v117 = vmul.f32 %v27, %v114
  %v118 = vmul.f32 %v28, %v114
  %v119 = vadd.f32 %v108, %v116
  %v120 = vadd.f32 %v109, %v117
  %v121 = vadd.f32 %v110, %v118
  %122 = vrot.lane.b32.xlu0 %v103, 126
  %v123 = vpop.permute.xlu0 %122
  %s124 = vtos %v123
  %v125 = vstv %s124
  %v127 = vmul.f32 %v30, %v125
  %v128 = vmul.f32 %v31, %v125
  %v129 = vmul.f32 %v32, %v125
  %v130 = vadd.f32 %v119, %v127
  %v131 = vadd.f32 %v120, %v128
  %v132 = vadd.f32 %v121, %v129
  %133 = vrot.lane.b32.xlu0 %v103, 125
  %v134 = vpop.permute.xlu0 %133
  %s135 = vtos %v134
  %v136 = vstv %s135
  %v138 = vadd.f32 %v130, %v136
  %v139 = vadd.f32 %v131, %v136
  %v140 = vadd.f32 %v132, %v136
  %v141 = vmin.f32 %v138, 0.0
  %v142 = vmin.f32 %v139, 0.0
  %v143 = vmin.f32 %v140, 0.0
  %v144 = vmul.f32 %v141, 1.442695
  %v145 = vpow.pop %v144
  %v146 = vmul.f32 %v142, 1.442695
  %v147 = vpow.pop %v146
  %v148 = vmul.f32 %v143, 1.442695
  %v149 = vpow.pop %v148
  %v150 = vmul.f32 %v145, 1.7580993
  %v151 = vmul.f32 %v147, 1.7580993
  %v152 = vmul.f32 %v149, 1.7580993
  %v153 = vsub.f32 %v150, 1.7580993
  %v154 = vsub.f32 %v151, 1.7580993
  %v155 = vsub.f32 %v152, 1.7580993
  %vm156 = vcmp.gt.f32.partialorder %v138, 0.0
  %vm157 = vcmp.gt.f32.partialorder %v139, 0.0
  %vm158 = vcmp.gt.f32.partialorder %v140, 0.0
  %v159 = vmul.f32 %v138, 1.050701
  %v160 = vmul.f32 %v139, 1.050701
  %v161 = vmul.f32 %v140, 1.050701
  %v162 = vsel %vm156, %v159, %v153
  %v163 = vsel %vm157, %v160, %v154
  %v164 = vsel %vm158, %v161, %v155
  %165 = vrot.lane.b32.xlu0 %v103, 124
  %v166 = vpop.permute.xlu0 %165
  %s167 = vtos %v166
  %v168 = vstv %s167
  %v170 = vmul.f32 %v162, %v168
  %v171 = vmul.f32 %v163, %v168
  %v172 = vmul.f32 %v164, %v168
  %v173 = vadd.f32 %v100, %v170
  %v174 = vadd.f32 %v101, %v171
  %v175 = vadd.f32 %v102, %v172
  %v176 = vld [vmem:[%s2 + $0x2] sm:$0x1]
  %s178 = vtos %v176
  %v179 = vstv %s178
  %v181 = vmul.f32 %v22, %v179
  %v182 = vmul.f32 %v23, %v179
  %v183 = vmul.f32 %v24, %v179
  %184 = vrot.lane.b32.xlu0 %v176, 127
  %v185 = vpop.permute.xlu0 %184
  %s186 = vtos %v185
  %v187 = vstv %s186
  %v189 = vmul.f32 %v26, %v187
  %v190 = vmul.f32 %v27, %v187
  %v191 = vmul.f32 %v28, %v187
  %v192 = vadd.f32 %v181, %v189
  %v193 = vadd.f32 %v182, %v190
  %v194 = vadd.f32 %v183, %v191
  %195 = vrot.lane.b32.xlu0 %v176, 126
  %v196 = vpop.permute.xlu0 %195
  %s197 = vtos %v196
  %v198 = vstv %s197
  %v200 = vmul.f32 %v30, %v198
  %v201 = vmul.f32 %v31, %v198
  %v202 = vmul.f32 %v32, %v198
  %v203 = vadd.f32 %v192, %v200
  %v204 = vadd.f32 %v193, %v201
  %v205 = vadd.f32 %v194, %v202
  %206 = vrot.lane.b32.xlu0 %v176, 125
  %v207 = vpop.permute.xlu0 %206
  %s208 = vtos %v207
  %v209 = vstv %s208
  %v211 = vadd.f32 %v203, %v209
  %v212 = vadd.f32 %v204, %v209
  %v213 = vadd.f32 %v205, %v209
  %v214 = vmin.f32 %v211, 0.0
  %v215 = vmin.f32 %v212, 0.0
  %v216 = vmin.f32 %v213, 0.0
  %v217 = vmul.f32 %v214, 1.442695
  %v218 = vpow.pop %v217
  %v219 = vmul.f32 %v215, 1.442695
  %v220 = vpow.pop %v219
  %v221 = vmul.f32 %v216, 1.442695
  %v222 = vpow.pop %v221
  %v223 = vmul.f32 %v218, 1.7580993
  %v224 = vmul.f32 %v220, 1.7580993
  %v225 = vmul.f32 %v222, 1.7580993
  %v226 = vsub.f32 %v223, 1.7580993
  %v227 = vsub.f32 %v224, 1.7580993
  %v228 = vsub.f32 %v225, 1.7580993
  %vm229 = vcmp.gt.f32.partialorder %v211, 0.0
  %vm230 = vcmp.gt.f32.partialorder %v212, 0.0
  %vm231 = vcmp.gt.f32.partialorder %v213, 0.0
  %v232 = vmul.f32 %v211, 1.050701
  %v233 = vmul.f32 %v212, 1.050701
  %v234 = vmul.f32 %v213, 1.050701
  %v235 = vsel %vm229, %v232, %v226
  %v236 = vsel %vm230, %v233, %v227
  %v237 = vsel %vm231, %v234, %v228
  %238 = vrot.lane.b32.xlu0 %v176, 124
  %v239 = vpop.permute.xlu0 %238
  %s240 = vtos %v239
  %v241 = vstv %s240
  %v243 = vmul.f32 %v235, %v241
  %v244 = vmul.f32 %v236, %v241
  %v245 = vmul.f32 %v237, %v241
  %v246 = vadd.f32 %v173, %v243
  %v247 = vadd.f32 %v174, %v244
  %v248 = vadd.f32 %v175, %v245
  %v249 = vld [vmem:[%s2 + $0x3] sm:$0x1]
  %s251 = vtos %v249
  %v252 = vstv %s251
  %v254 = vmul.f32 %v22, %v252
  %v255 = vmul.f32 %v23, %v252
  %v256 = vmul.f32 %v24, %v252
  %257 = vrot.lane.b32.xlu0 %v249, 127
  %v258 = vpop.permute.xlu0 %257
  %s259 = vtos %v258
  %v260 = vstv %s259
  %v262 = vmul.f32 %v26, %v260
  %v263 = vmul.f32 %v27, %v260
  %v264 = vmul.f32 %v28, %v260
  %v265 = vadd.f32 %v254, %v262
  %v266 = vadd.f32 %v255, %v263
  %v267 = vadd.f32 %v256, %v264
  %268 = vrot.lane.b32.xlu0 %v249, 126
  %v269 = vpop.permute.xlu0 %268
  %s270 = vtos %v269
  %v271 = vstv %s270
  %v273 = vmul.f32 %v30, %v271
  %v274 = vmul.f32 %v31, %v271
  %v275 = vmul.f32 %v32, %v271
  %v276 = vadd.f32 %v265, %v273
  %v277 = vadd.f32 %v266, %v274
  %v278 = vadd.f32 %v267, %v275
  %279 = vrot.lane.b32.xlu0 %v249, 125
  %v280 = vpop.permute.xlu0 %279
  %s281 = vtos %v280
  %v282 = vstv %s281
  %v284 = vadd.f32 %v276, %v282
  %v285 = vadd.f32 %v277, %v282
  %v286 = vadd.f32 %v278, %v282
  %v287 = vmin.f32 %v284, 0.0
  %v288 = vmin.f32 %v285, 0.0
  %v289 = vmin.f32 %v286, 0.0
  %v290 = vmul.f32 %v287, 1.442695
  %v291 = vpow.pop %v290
  %v292 = vmul.f32 %v288, 1.442695
  %v293 = vpow.pop %v292
  %v294 = vmul.f32 %v289, 1.442695
  %v295 = vpow.pop %v294
  %v296 = vmul.f32 %v291, 1.7580993
  %v297 = vmul.f32 %v293, 1.7580993
  %v298 = vmul.f32 %v295, 1.7580993
  %v299 = vsub.f32 %v296, 1.7580993
  %v300 = vsub.f32 %v297, 1.7580993
  %v301 = vsub.f32 %v298, 1.7580993
  %vm302 = vcmp.gt.f32.partialorder %v284, 0.0
  %vm303 = vcmp.gt.f32.partialorder %v285, 0.0
  %vm304 = vcmp.gt.f32.partialorder %v286, 0.0
  %v305 = vmul.f32 %v284, 1.050701
  %v306 = vmul.f32 %v285, 1.050701
  %v307 = vmul.f32 %v286, 1.050701
  %v308 = vsel %vm302, %v305, %v299
  %v309 = vsel %vm303, %v306, %v300
  %v310 = vsel %vm304, %v307, %v301
  %311 = vrot.lane.b32.xlu0 %v249, 124
  %v312 = vpop.permute.xlu0 %311
  %s313 = vtos %v312
  %v314 = vstv %s313
  %v316 = vmul.f32 %v308, %v314
  %v317 = vmul.f32 %v309, %v314
  %v318 = vmul.f32 %v310, %v314
  %v319 = vadd.f32 %v246, %v316
  %v320 = vadd.f32 %v247, %v317
  %v321 = vadd.f32 %v248, %v318
  %v322 = vld [vmem:[%s2 + $0x4] sm:$0x1]
  %s324 = vtos %v322
  %v325 = vstv %s324
  %v327 = vmul.f32 %v22, %v325
  %v328 = vmul.f32 %v23, %v325
  %v329 = vmul.f32 %v24, %v325
  %330 = vrot.lane.b32.xlu0 %v322, 127
  %v331 = vpop.permute.xlu0 %330
  %s332 = vtos %v331
  %v333 = vstv %s332
  %v335 = vmul.f32 %v26, %v333
  %v336 = vmul.f32 %v27, %v333
  %v337 = vmul.f32 %v28, %v333
  %v338 = vadd.f32 %v327, %v335
  %v339 = vadd.f32 %v328, %v336
  %v340 = vadd.f32 %v329, %v337
  %341 = vrot.lane.b32.xlu0 %v322, 126
  %v342 = vpop.permute.xlu0 %341
  %s343 = vtos %v342
  %v344 = vstv %s343
  %v346 = vmul.f32 %v30, %v344
  %v347 = vmul.f32 %v31, %v344
  %v348 = vmul.f32 %v32, %v344
  %v349 = vadd.f32 %v338, %v346
  %v350 = vadd.f32 %v339, %v347
  %v351 = vadd.f32 %v340, %v348
  %352 = vrot.lane.b32.xlu0 %v322, 125
  %v353 = vpop.permute.xlu0 %352
  %s354 = vtos %v353
  %v355 = vstv %s354
  %v357 = vadd.f32 %v349, %v355
  %v358 = vadd.f32 %v350, %v355
  %v359 = vadd.f32 %v351, %v355
  %v360 = vmin.f32 %v357, 0.0
  %v361 = vmin.f32 %v358, 0.0
  %v362 = vmin.f32 %v359, 0.0
  %v363 = vmul.f32 %v360, 1.442695
  %v364 = vpow.pop %v363
  %v365 = vmul.f32 %v361, 1.442695
  %v366 = vpow.pop %v365
  %v367 = vmul.f32 %v362, 1.442695
  %v368 = vpow.pop %v367
  %v369 = vmul.f32 %v364, 1.7580993
  %v370 = vmul.f32 %v366, 1.7580993
  %v371 = vmul.f32 %v368, 1.7580993
  %v372 = vsub.f32 %v369, 1.7580993
  %v373 = vsub.f32 %v370, 1.7580993
  %v374 = vsub.f32 %v371, 1.7580993
  %vm375 = vcmp.gt.f32.partialorder %v357, 0.0
  %vm376 = vcmp.gt.f32.partialorder %v358, 0.0
  %vm377 = vcmp.gt.f32.partialorder %v359, 0.0
  %v378 = vmul.f32 %v357, 1.050701
  %v379 = vmul.f32 %v358, 1.050701
  %v380 = vmul.f32 %v359, 1.050701
  %v381 = vsel %vm375, %v378, %v372
  %v382 = vsel %vm376, %v379, %v373
  %v383 = vsel %vm377, %v380, %v374
  %384 = vrot.lane.b32.xlu0 %v322, 124
  %v385 = vpop.permute.xlu0 %384
  %s386 = vtos %v385
  %v387 = vstv %s386
  %v389 = vmul.f32 %v381, %v387
  %v390 = vmul.f32 %v382, %v387
  %v391 = vmul.f32 %v383, %v387
  %v392 = vadd.f32 %v319, %v389
  %v393 = vadd.f32 %v320, %v390
  %v394 = vadd.f32 %v321, %v391
  %v395 = vld [vmem:[%s2 + $0x5] sm:$0x1]
  %s397 = vtos %v395
  %v398 = vstv %s397
  %v400 = vmul.f32 %v22, %v398
  %v401 = vmul.f32 %v23, %v398
  %v402 = vmul.f32 %v24, %v398
  %403 = vrot.lane.b32.xlu0 %v395, 127
  %v404 = vpop.permute.xlu0 %403
  %s405 = vtos %v404
  %v406 = vstv %s405
  %v408 = vmul.f32 %v26, %v406
  %v409 = vmul.f32 %v27, %v406
  %v410 = vmul.f32 %v28, %v406
  %v411 = vadd.f32 %v400, %v408
  %v412 = vadd.f32 %v401, %v409
  %v413 = vadd.f32 %v402, %v410
  %414 = vrot.lane.b32.xlu0 %v395, 126
  %v415 = vpop.permute.xlu0 %414
  %s416 = vtos %v415
  %v417 = vstv %s416
  %v419 = vmul.f32 %v30, %v417
  %v420 = vmul.f32 %v31, %v417
  %v421 = vmul.f32 %v32, %v417
  %v422 = vadd.f32 %v411, %v419
  %v423 = vadd.f32 %v412, %v420
  %v424 = vadd.f32 %v413, %v421
  %425 = vrot.lane.b32.xlu0 %v395, 125
  %v426 = vpop.permute.xlu0 %425
  %s427 = vtos %v426
  %v428 = vstv %s427
  %v430 = vadd.f32 %v422, %v428
  %v431 = vadd.f32 %v423, %v428
  %v432 = vadd.f32 %v424, %v428
  %v433 = vmin.f32 %v430, 0.0
  %v434 = vmin.f32 %v431, 0.0
  %v435 = vmin.f32 %v432, 0.0
  %v436 = vmul.f32 %v433, 1.442695
  %v437 = vpow.pop %v436
  %v438 = vmul.f32 %v434, 1.442695
  %v439 = vpow.pop %v438
  %v440 = vmul.f32 %v435, 1.442695
  %v441 = vpow.pop %v440
  %v442 = vmul.f32 %v437, 1.7580993
  %v443 = vmul.f32 %v439, 1.7580993
  %v444 = vmul.f32 %v441, 1.7580993
  %v445 = vsub.f32 %v442, 1.7580993
  %v446 = vsub.f32 %v443, 1.7580993
  %v447 = vsub.f32 %v444, 1.7580993
  %vm448 = vcmp.gt.f32.partialorder %v430, 0.0
  %vm449 = vcmp.gt.f32.partialorder %v431, 0.0
  %vm450 = vcmp.gt.f32.partialorder %v432, 0.0
  %v451 = vmul.f32 %v430, 1.050701
  %v452 = vmul.f32 %v431, 1.050701
  %v453 = vmul.f32 %v432, 1.050701
  %v454 = vsel %vm448, %v451, %v445
  %v455 = vsel %vm449, %v452, %v446
  %v456 = vsel %vm450, %v453, %v447
  %457 = vrot.lane.b32.xlu0 %v395, 124
  %v458 = vpop.permute.xlu0 %457
  %s459 = vtos %v458
  %v460 = vstv %s459
  %v462 = vmul.f32 %v454, %v460
  %v463 = vmul.f32 %v455, %v460
  %v464 = vmul.f32 %v456, %v460
  %v465 = vadd.f32 %v392, %v462
  %v466 = vadd.f32 %v393, %v463
  %v467 = vadd.f32 %v394, %v464
  %v468 = vld [vmem:[%s2 + $0x6] sm:$0x1]
  %s470 = vtos %v468
  %v471 = vstv %s470
  %v473 = vmul.f32 %v22, %v471
  %v474 = vmul.f32 %v23, %v471
  %v475 = vmul.f32 %v24, %v471
  %476 = vrot.lane.b32.xlu0 %v468, 127
  %v477 = vpop.permute.xlu0 %476
  %s478 = vtos %v477
  %v479 = vstv %s478
  %v481 = vmul.f32 %v26, %v479
  %v482 = vmul.f32 %v27, %v479
  %v483 = vmul.f32 %v28, %v479
  %v484 = vadd.f32 %v473, %v481
  %v485 = vadd.f32 %v474, %v482
  %v486 = vadd.f32 %v475, %v483
  %487 = vrot.lane.b32.xlu0 %v468, 126
  %v488 = vpop.permute.xlu0 %487
  %s489 = vtos %v488
  %v490 = vstv %s489
  %v492 = vmul.f32 %v30, %v490
  %v493 = vmul.f32 %v31, %v490
  %v494 = vmul.f32 %v32, %v490
  %v495 = vadd.f32 %v484, %v492
  %v496 = vadd.f32 %v485, %v493
  %v497 = vadd.f32 %v486, %v494
  %498 = vrot.lane.b32.xlu0 %v468, 125
  %v499 = vpop.permute.xlu0 %498
  %s500 = vtos %v499
  %v501 = vstv %s500
  %v503 = vadd.f32 %v495, %v501
  %v504 = vadd.f32 %v496, %v501
  %v505 = vadd.f32 %v497, %v501
  %v506 = vmin.f32 %v503, 0.0
  %v507 = vmin.f32 %v504, 0.0
  %v508 = vmin.f32 %v505, 0.0
  %v509 = vmul.f32 %v506, 1.442695
  %v510 = vpow.pop %v509
  %v511 = vmul.f32 %v507, 1.442695
  %v512 = vpow.pop %v511
  %v513 = vmul.f32 %v508, 1.442695
  %v514 = vpow.pop %v513
  %v515 = vmul.f32 %v510, 1.7580993
  %v516 = vmul.f32 %v512, 1.7580993
  %v517 = vmul.f32 %v514, 1.7580993
  %v518 = vsub.f32 %v515, 1.7580993
  %v519 = vsub.f32 %v516, 1.7580993
  %v520 = vsub.f32 %v517, 1.7580993
  %vm521 = vcmp.gt.f32.partialorder %v503, 0.0
  %vm522 = vcmp.gt.f32.partialorder %v504, 0.0
  %vm523 = vcmp.gt.f32.partialorder %v505, 0.0
  %v524 = vmul.f32 %v503, 1.050701
  %v525 = vmul.f32 %v504, 1.050701
  %v526 = vmul.f32 %v505, 1.050701
  %v527 = vsel %vm521, %v524, %v518
  %v528 = vsel %vm522, %v525, %v519
  %v529 = vsel %vm523, %v526, %v520
  %530 = vrot.lane.b32.xlu0 %v468, 124
  %v531 = vpop.permute.xlu0 %530
  %s532 = vtos %v531
  %v533 = vstv %s532
  %v535 = vmul.f32 %v527, %v533
  %v536 = vmul.f32 %v528, %v533
  %v537 = vmul.f32 %v529, %v533
  %v538 = vadd.f32 %v465, %v535
  %v539 = vadd.f32 %v466, %v536
  %v540 = vadd.f32 %v467, %v537
  %v541 = vld [vmem:[%s2 + $0x7] sm:$0x1]
  %s543 = vtos %v541
  %v544 = vstv %s543
  %v546 = vmul.f32 %v22, %v544
  %v547 = vmul.f32 %v23, %v544
  %v548 = vmul.f32 %v24, %v544
  %549 = vrot.lane.b32.xlu0 %v541, 127
  %v550 = vpop.permute.xlu0 %549
  %s551 = vtos %v550
  %v552 = vstv %s551
  %v554 = vmul.f32 %v26, %v552
  %v555 = vmul.f32 %v27, %v552
  %v556 = vmul.f32 %v28, %v552
  %v557 = vadd.f32 %v546, %v554
  %v558 = vadd.f32 %v547, %v555
  %v559 = vadd.f32 %v548, %v556
  %560 = vrot.lane.b32.xlu0 %v541, 126
  %v561 = vpop.permute.xlu0 %560
  %s562 = vtos %v561
  %v563 = vstv %s562
  %v565 = vmul.f32 %v30, %v563
  %v566 = vmul.f32 %v31, %v563
  %v567 = vmul.f32 %v32, %v563
  %v568 = vadd.f32 %v557, %v565
  %v569 = vadd.f32 %v558, %v566
  %v570 = vadd.f32 %v559, %v567
  %571 = vrot.lane.b32.xlu0 %v541, 125
  %v572 = vpop.permute.xlu0 %571
  %s573 = vtos %v572
  %v574 = vstv %s573
  %v576 = vadd.f32 %v568, %v574
  %v577 = vadd.f32 %v569, %v574
  %v578 = vadd.f32 %v570, %v574
  %v579 = vmin.f32 %v576, 0.0
  %v580 = vmin.f32 %v577, 0.0
  %v581 = vmin.f32 %v578, 0.0
  %v582 = vmul.f32 %v579, 1.442695
  %v583 = vpow.pop %v582
  %v584 = vmul.f32 %v580, 1.442695
  %v585 = vpow.pop %v584
  %v586 = vmul.f32 %v581, 1.442695
  %v587 = vpow.pop %v586
  %v588 = vmul.f32 %v583, 1.7580993
  %v589 = vmul.f32 %v585, 1.7580993
  %v590 = vmul.f32 %v587, 1.7580993
  %v591 = vsub.f32 %v588, 1.7580993
  %v592 = vsub.f32 %v589, 1.7580993
  %v593 = vsub.f32 %v590, 1.7580993
  %vm594 = vcmp.gt.f32.partialorder %v576, 0.0
  %vm595 = vcmp.gt.f32.partialorder %v577, 0.0
  %vm596 = vcmp.gt.f32.partialorder %v578, 0.0
  %v597 = vmul.f32 %v576, 1.050701
  %v598 = vmul.f32 %v577, 1.050701
  %v599 = vmul.f32 %v578, 1.050701
  %v600 = vsel %vm594, %v597, %v591
  %v601 = vsel %vm595, %v598, %v592
  %v602 = vsel %vm596, %v599, %v593
  %603 = vrot.lane.b32.xlu0 %v541, 124
  %v604 = vpop.permute.xlu0 %603
  %s605 = vtos %v604
  %v606 = vstv %s605
  %v608 = vmul.f32 %v600, %v606
  %v609 = vmul.f32 %v601, %v606
  %v610 = vmul.f32 %v602, %v606
  %v611 = vadd.f32 %v538, %v608
  %v612 = vadd.f32 %v539, %v609
  %v613 = vadd.f32 %v540, %v610
  %614 = vrot.lane.b32.xlu0 %v33, 123
  %v615 = vpop.permute.xlu0 %614
  %s616 = vtos %v615
  %v617 = vstv %s616
  %v619 = vadd.f32 %v611, %v617
  %v620 = vadd.f32 %v612, %v617
  %v621 = vadd.f32 %v613, %v617
  %v622 = vmin.f32 %v619, 0.0
  %v623 = vmin.f32 %v620, 0.0
  %v624 = vmin.f32 %v621, 0.0
  %v625 = vmul.f32 %v622, 1.442695
  %v626 = vpow.pop %v625
  %v627 = vmul.f32 %v623, 1.442695
  %v628 = vpow.pop %v627
  %v629 = vmul.f32 %v624, 1.442695
  %v630 = vpow.pop %v629
  %v631 = vmul.f32 %v626, 1.7580993
  %v632 = vmul.f32 %v628, 1.7580993
  %v633 = vmul.f32 %v630, 1.7580993
  %v634 = vsub.f32 %v631, 1.7580993
  %v635 = vsub.f32 %v632, 1.7580993
  %v636 = vsub.f32 %v633, 1.7580993
  %vm637 = vcmp.gt.f32.partialorder %v619, 0.0
  %vm638 = vcmp.gt.f32.partialorder %v620, 0.0
  %vm639 = vcmp.gt.f32.partialorder %v621, 0.0
  %v640 = vmul.f32 %v619, 1.050701
  %v641 = vmul.f32 %v620, 1.050701
  %v642 = vmul.f32 %v621, 1.050701
  %v643 = vsel %vm637, %v640, %v634
  %v644 = vsel %vm638, %v641, %v635
  %v645 = vsel %vm639, %v642, %v636
  %646 = vst [vmem:[%s5] sm:$0xff] %v643
  %647 = vst [vmem:[%s5 + $0x8] sm:$0xff] %v644
  %648 = vst [vmem:[%s5 + $0x10] sm:$0xf] %v645
  %v649 = vld [vmem:[%s1] sm:$0x1]
  %v650 = vld [vmem:[%s1 + $0x1] sm:$0x1]
  %v651 = vld [vmem:[%s2] sm:$0xff]
  %v652 = vld [vmem:[%s2 + $0x8] sm:$0xff]
  %v653 = vperm.slane %v649, 0
  %655 = vset.pattern.permute.xlu0 6
  %656 = vperm.xlu0 %655, %v651
  %v657 = vpop.permute.xlu0 %656
  %660 = vset.pattern.permute.xlu0 6
  %661 = vperm.xlu0 %660, %v652
  %v662 = vpop.permute.xlu0 %661
  %v664 = vmul.f32 %v653, %v657
  %v665 = vmul.f32 %v653, %v662
  %v666 = vperm.slane %v650, 0
  %667 = vset.pattern.permute.xlu0 7
  %668 = vperm.xlu0 %667, %v651
  %v669 = vpop.permute.xlu0 %668
  %671 = vset.pattern.permute.xlu0 7
  %672 = vperm.xlu0 %671, %v652
  %v673 = vpop.permute.xlu0 %672
  %v675 = vmul.f32 %v666, %v669
  %v676 = vmul.f32 %v666, %v673
  %v677 = vadd.f32 %v664, %v675
  %v678 = vadd.f32 %v665, %v676
  %679 = vset.pattern.permute.xlu0 8
  %680 = vperm.xlu0 %679, %v651
  %v681 = vpop.permute.xlu0 %680
  %683 = vset.pattern.permute.xlu0 8
  %684 = vperm.xlu0 %683, %v652
  %v685 = vpop.permute.xlu0 %684
  %v687 = vadd.f32 %v677, %v681
  %v688 = vadd.f32 %v678, %v685
  %v689 = vmin.f32 %v687, 0.0
  %v690 = vmin.f32 %v688, 0.0
  %v691 = vmul.f32 %v689, 1.442695
  %v692 = vpow.pop %v691
  %v693 = vmul.f32 %v690, 1.442695
  %v694 = vpow.pop %v693
  %v695 = vmul.f32 %v692, 1.7580993
  %v696 = vmul.f32 %v694, 1.7580993
  %v697 = vsub.f32 %v695, 1.7580993
  %v698 = vsub.f32 %v696, 1.7580993
  %vm699 = vcmp.gt.f32.partialorder %v687, 0.0
  %vm700 = vcmp.gt.f32.partialorder %v688, 0.0
  %v701 = vmul.f32 %v687, 1.050701
  %v702 = vmul.f32 %v688, 1.050701
  %v703 = vsel %vm699, %v701, %v697
  %v704 = vsel %vm700, %v702, %v698
  %705 = vset.pattern.permute.xlu0 9
  %706 = vperm.xlu0 %705, %v651
  %v707 = vpop.permute.xlu0 %706
  %709 = vset.pattern.permute.xlu0 9
  %710 = vperm.xlu0 %709, %v652
  %v711 = vpop.permute.xlu0 %710
  %v713 = vmul.f32 %v703, %v707
  %v714 = vmul.f32 %v704, %v711
  %v715 = vadd.f32 %v713, %v714
  %v716 = vrot.slane %v715, 4
  %v717 = vadd.f32 %v715, %v716
  %v718 = vrot.slane %v717, 2
  %v719 = vadd.f32 %v717, %v718
  %v720 = vrot.slane %v719, 1
  %v721 = vadd.f32 %v719, %v720
  %v722 = vld [vmem:[%s2] sm:$0x1]
  %724 = vset.pattern.permute.xlu0 11
  %725 = vperm.xlu0 %724, %v722
  %v726 = vpop.permute.xlu0 %725
  %v728 = vadd.f32 %v721, %v726
  %v729 = vmin.f32 %v728, 0.0
  %v730 = vmul.f32 %v729, 1.442695
  %v731 = vpow.pop %v730
  %v732 = vmul.f32 %v731, 1.7580993
  %v733 = vsub.f32 %v732, 1.7580993
  %vm734 = vcmp.gt.f32.partialorder %v728, 0.0
  %v735 = vmul.f32 %v728, 1.050701
  %v736 = vsel %vm734, %v735, %v733
  %737 = vset.pattern.permute.xlu0 10
  %738 = vperm.xlu0 %737, %v651
  %v739 = vpop.permute.xlu0 %738
  %741 = vset.pattern.permute.xlu0 10
  %742 = vperm.xlu0 %741, %v652
  %v743 = vpop.permute.xlu0 %742
  %v745 = vmul.f32 %v703, %v739
  %v746 = vmul.f32 %v704, %v743
  %v747 = vadd.f32 %v745, %v746
  %v748 = vrot.slane %v747, 4
  %v749 = vadd.f32 %v747, %v748
  %v750 = vrot.slane %v749, 2
  %v751 = vadd.f32 %v749, %v750
  %v752 = vrot.slane %v751, 1
  %v753 = vadd.f32 %v751, %v752
  %v754 = vld [vmem:[%s2 + $0x1] sm:$0x1]
  %756 = vset.pattern.permute.xlu0 11
  %757 = vperm.xlu0 %756, %v754
  %v758 = vpop.permute.xlu0 %757
  %v760 = vadd.f32 %v753, %v758
  %v761 = vmin.f32 %v760, 0.0
  %v762 = vmul.f32 %v761, 1.442695
  %v763 = vpow.pop %v762
  %v764 = vmul.f32 %v763, 1.7580993
  %v765 = vsub.f32 %v764, 1.7580993
  %vm766 = vcmp.gt.f32.partialorder %v760, 0.0
  %v767 = vmul.f32 %v760, 1.050701
  %v768 = vsel %vm766, %v767, %v765
  %v769 = vld [vmem:[%s4] sm:$0xff]
  %v770 = vld [vmem:[%s4 + $0x8] sm:$0xff]
  %v771 = vld [vmem:[%s4 + $0x10] sm:$0xf]
  %773 = vset.pattern.permute.xlu0 0
  %774 = vperm.xlu0 %773, %v769
  %v775 = vpop.permute.xlu0 %774
  %778 = vset.pattern.permute.xlu0 0
  %779 = vperm.xlu0 %778, %v770
  %v780 = vpop.permute.xlu0 %779
  %783 = vset.pattern.permute.xlu0 0
  %784 = vperm.xlu0 %783, %v771
  %v785 = vpop.permute.xlu0 %784
  %v787 = vmul.f32 %v643, %v775
  %v788 = vmul.f32 %v644, %v780
  %v789 = vmul.f32 %v645, %v785
  %v790 = vadd.f32 %v787, %v788
  %vm791 = vcmask 1043456
  %v792 = vsel %vm791, %v789, 0.0
  %v793 = vadd.f32 %v790, %v792
  %v794 = vrot.slane %v793, 4
  %v795 = vadd.f32 %v793, %v794
  %v796 = vrot.slane %v795, 2
  %v797 = vadd.f32 %v795, %v796
  %v798 = vrot.slane %v797, 1
  %v799 = vadd.f32 %v797, %v798
  %800 = vset.pattern.permute.xlu0 1
  %801 = vperm.xlu0 %800, %v769
  %v802 = vpop.permute.xlu0 %801
  %804 = vset.pattern.permute.xlu0 1
  %805 = vperm.xlu0 %804, %v770
  %v806 = vpop.permute.xlu0 %805
  %808 = vset.pattern.permute.xlu0 1
  %809 = vperm.xlu0 %808, %v771
  %v810 = vpop.permute.xlu0 %809
  %v812 = vmul.f32 %v643, %v802
  %v813 = vmul.f32 %v644, %v806
  %v814 = vmul.f32 %v645, %v810
  %v815 = vadd.f32 %v812, %v813
  %v816 = vsel %vm791, %v814, 0.0
  %v817 = vadd.f32 %v815, %v816
  %v818 = vrot.slane %v817, 4
  %v819 = vadd.f32 %v817, %v818
  %v820 = vrot.slane %v819, 2
  %v821 = vadd.f32 %v819, %v820
  %v822 = vrot.slane %v821, 1
  %v823 = vadd.f32 %v821, %v822
  %824 = vset.pattern.permute.xlu0 2
  %825 = vperm.xlu0 %824, %v769
  %v826 = vpop.permute.xlu0 %825
  %828 = vset.pattern.permute.xlu0 2
  %829 = vperm.xlu0 %828, %v770
  %v830 = vpop.permute.xlu0 %829
  %832 = vset.pattern.permute.xlu0 2
  %833 = vperm.xlu0 %832, %v771
  %v834 = vpop.permute.xlu0 %833
  %v836 = vmul.f32 %v643, %v826
  %v837 = vmul.f32 %v644, %v830
  %v838 = vmul.f32 %v645, %v834
  %v839 = vadd.f32 %v836, %v837
  %v840 = vsel %vm791, %v838, 0.0
  %v841 = vadd.f32 %v839, %v840
  %v842 = vrot.slane %v841, 4
  %v843 = vadd.f32 %v841, %v842
  %v844 = vrot.slane %v843, 2
  %v845 = vadd.f32 %v843, %v844
  %v846 = vrot.slane %v845, 1
  %v847 = vadd.f32 %v845, %v846
  %vm848 = vcmask 1040384
  %v849 = vsel %vm848, %v799, %v823
  %vm850 = vcmask 1041408
  %v851 = vsel %vm850, %v849, %v847
  %v852 = vld [vmem:[%s3] sm:$0x7]
  %v853 = vperm.slane %v736, 0
  %855 = vset.pattern.permute.xlu0 0
  %856 = vperm.xlu0 %855, %v852
  %v857 = vpop.permute.xlu0 %856
  %v859 = vmul.f32 %v853, %v857
  %v860 = vadd.f32 %v851, %v859
  %v861 = vperm.slane %v768, 0
  %862 = vset.pattern.permute.xlu0 1
  %863 = vperm.xlu0 %862, %v852
  %v864 = vpop.permute.xlu0 %863
  %v866 = vmul.f32 %v861, %v864
  %v867 = vadd.f32 %v860, %v866
  %868 = vset.pattern.permute.xlu0 2
  %869 = vperm.xlu0 %868, %v852
  %v870 = vpop.permute.xlu0 %869
  %v872 = vadd.f32 %v867, %v870
  %v873 = vmin.f32 %v872, 0.0
  %v874 = vmul.f32 %v873, 1.442695
  %v875 = vpow.pop %v874
  %v876 = vmul.f32 %v875, 1.7580993
  %v877 = vsub.f32 %v876, 1.7580993
  %vm878 = vcmp.gt.f32.partialorder %v872, 0.0
  %v879 = vmul.f32 %v872, 1.050701
  %v880 = vsel %vm878, %v879, %v877
  %881 = vset.pattern.permute.xlu0 3
  %882 = vperm.xlu0 %881, %v852
  %v883 = vpop.permute.xlu0 %882
  %v885 = vmul.f32 %v880, %v883
  %vm886 = vcmask 1042432
  %v887 = vsel %vm886, %v885, 0.0
  %v888 = vrot.slane %v887, 4
  %v889 = vadd.f32 %v887, %v888
  %v890 = vrot.slane %v889, 2
  %v891 = vadd.f32 %v889, %v890
  %v892 = vrot.slane %v891, 1
  %v893 = vadd.f32 %v891, %v892
  %v894 = vld [vmem:[%s3] sm:$0x1]
  %896 = vset.pattern.permute.xlu0 4
  %897 = vperm.xlu0 %896, %v894
  %v898 = vpop.permute.xlu0 %897
  %v900 = vadd.f32 %v893, %v898
  %901 = vst [vmem:[%s6] sm:$0x1] %v900
  // Predicated region
  $region22: #{fg_forward.1} parent=0 // pred_check
    _
  $region23: #{fg_forward.1} parent=0 // pred_check_branch
    %903 = sbr.rel (0) target = $region25
  $region24: #{fg_forward.1} parent=0 // pred_region
    _
  $region25: #{fg_forward.1} parent=0 // pred_fallthru
    _
  // Predicated region
  $region26: #{fg_forward.1} parent=0 // pred_check
    _
  $region27: #{fg_forward.1} parent=0 // pred_check_branch
    %905 = sbr.rel (0) target = $region29
  $region28: #{fg_forward.1} parent=0 // pred_region
    _
  $region29: #{fg_forward.1} parent=0 // pred_fallthru
    _
  // Predicated region
  $region30: #{fg_forward.1} parent=0 // pred_check
    _
  $region31: #{fg_forward.1} parent=0 // pred_check_branch
    %907 = sbr.rel (0) target = $region33
  $region32: #{fg_forward.1} parent=0 // pred_region
    _
  $region33: #{fg_forward.1} parent=0 // pred_fallthru
    _
  // Predicated region
  $region34: #{fg_forward.1} parent=0 // pred_check
    _
  $region35: #{fg_forward.1} parent=0 // pred_check_branch
    %909 = sbr.rel (0) target = $region37
  $region36: #{fg_forward.1} parent=0 // pred_region
    _
  $region37: #{fg_forward.1} parent=0 // pred_fallthru
    _

</llo_original>
